<compile_context>
chip_gen: v7x
topology: tpu7x:2x2x1
jax: 0.10.0
libtpu: 0.0.40
codegen_flags: <defaults>
</compile_context>

<pallas_src>
import functools

import jax
import jax.numpy as jnp
from jax import lax
from jax.experimental import pallas as pl
from jax.experimental.pallas import tpu as pltpu

LANE = 128
BN_EPS = 1e-5


def _round_up(v, m):
    return (v + m - 1) // m * m


def _pad2d(x, rows, cols):
    return jnp.pad(x, ((0, rows - x.shape[0]), (0, cols - x.shape[1])))


def _vmem_limit(nbytes):
    # double-buffering headroom; never below the 32 MiB scoped default.
    return int(max(32 << 20, 2 * nbytes + (4 << 20)))


# --------------------------------------------------------------------------
# Kernel A: conv1 (mean aggr + root path + L2 normalize) -> ReLU
#           + masked per-tile BatchNorm partial sums
# --------------------------------------------------------------------------
def _conv1_kernel(a_ref, x_ref, w1l_ref, b1l_ref, w1r_ref,
                  h_ref, psum_ref, psq_ref, *, tm, n_real):
    i = pl.program_id(0)
    start = pl.multiple_of(i * tm, tm)

    a = a_ref[...]                         # (tm, Np)  bf16, streamed row tile
    x_full = x_ref[...]                    # (Np, Fp)  bf16, resident
    x_tile = x_ref[pl.ds(start, tm), :]    # (tm, Fp)  bf16, root-path rows

    # mean aggregation over neighbors (row-normalized adjacency)
    agg = jnp.dot(a, x_full, preferred_element_type=jnp.float32)

    h = jnp.dot(agg.astype(jnp.bfloat16), w1l_ref[...],
                preferred_element_type=jnp.float32)
    h = h + b1l_ref[...]
    h = h + jnp.dot(x_tile, w1r_ref[...], preferred_element_type=jnp.float32)

    # F.normalize(p=2): rsqrt-and-multiply (EUP) instead of sqrt + divide
    inv = lax.rsqrt(jnp.maximum(jnp.sum(h * h, axis=-1, keepdims=True), 1e-24))
    h = h * inv

    # ReLU; zero out padded node rows so BatchNorm statistics stay exact
    h = jnp.maximum(h, 0.0)
    row_ids = start + lax.broadcasted_iota(jnp.int32, (tm, 1), 0)
    h = jnp.where(row_ids < n_real, h, 0.0)

    h_ref[...] = h
    s = jnp.sum(h, axis=0, keepdims=True)        # (1, Hp)
    sq = jnp.sum(h * h, axis=0, keepdims=True)   # (1, Hp)
    psum_ref[...] = jnp.broadcast_to(s, psum_ref.shape)
    psq_ref[...] = jnp.broadcast_to(sq, psq_ref.shape)


# --------------------------------------------------------------------------
# Kernel BN: apply batch-norm scale/shift, cast to bf16 for the next MXU pass
# --------------------------------------------------------------------------
def _bn_apply_kernel(h_ref, scale_ref, shift_ref, o_ref):
    o_ref[...] = (h_ref[...] * scale_ref[...] + shift_ref[...]).astype(jnp.bfloat16)


# --------------------------------------------------------------------------
# Kernel B: conv2 (mean aggr + root path + L2 normalize) -> fc
# --------------------------------------------------------------------------
def _conv2_fc_kernel(a_ref, hbn_ref, w2l_ref, b2l_ref, w2r_ref,
                     wfc_ref, bfc_ref, out_ref, *, tm):
    i = pl.program_id(0)
    start = pl.multiple_of(i * tm, tm)

    a = a_ref[...]                          # (tm, Np) bf16, streamed row tile
    hb_full = hbn_ref[...]                  # (Np, Hp) bf16, resident
    hb_tile = hbn_ref[pl.ds(start, tm), :]  # (tm, Hp) bf16

    agg = jnp.dot(a, hb_full, preferred_element_type=jnp.float32)
    h2 = jnp.dot(agg.astype(jnp.bfloat16), w2l_ref[...],
                 preferred_element_type=jnp.float32)
    h2 = h2 + b2l_ref[...]
    h2 = h2 + jnp.dot(hb_tile, w2r_ref[...], preferred_element_type=jnp.float32)

    inv = lax.rsqrt(jnp.maximum(jnp.sum(h2 * h2, axis=-1, keepdims=True), 1e-24))
    h2 = h2 * inv

    out_ref[...] = (jnp.dot(h2.astype(jnp.bfloat16), wfc_ref[...],
                            preferred_element_type=jnp.float32) + bfc_ref[...])


# --------------------------------------------------------------------------
# Wrapper
# --------------------------------------------------------------------------
def sage_forward(x, a_norm, params, *, tm=128):
    n_real, nfeat = x.shape
    nhid = params["w1l"].shape[1]
    nclass = params["wfc"].shape[1]

    np_ = _round_up(max(n_real, tm), tm)     # padded node count
    fp = _round_up(nfeat, LANE)
    hp = _round_up(nhid, LANE)
    cp = _round_up(nclass, LANE)
    num_tiles = np_ // tm

    f32, bf16 = jnp.float32, jnp.bfloat16

    # zero-padded, bf16 MXU operands (biases / BN affine stay f32)
    x_p = _pad2d(x, np_, fp).astype(bf16)
    a_p = _pad2d(a_norm, np_, np_).astype(bf16)
    w1l = _pad2d(params["w1l"], fp, hp).astype(bf16)
    w1r = _pad2d(params["w1r"], fp, hp).astype(bf16)
    b1l = _pad2d(params["b1l"], 1, hp).astype(f32)
    w2l = _pad2d(params["w2l"], hp, hp).astype(bf16)
    w2r = _pad2d(params["w2r"], hp, hp).astype(bf16)
    b2l = _pad2d(params["b2l"], 1, hp).astype(f32)
    wfc = _pad2d(params["wfc"], hp, cp).astype(bf16)
    bfc = _pad2d(params["bfc"], 1, cp).astype(f32)
    gamma = _pad2d(params["gamma"], 1, hp).astype(f32)
    beta = _pad2d(params["beta"], 1, hp).astype(f32)

    # ---------------- kernel A: conv1 + ReLU + BN partial sums ----------------
    bytes_a = (tm * np_ * 2 + np_ * fp * 2 + 2 * fp * hp * 2 + hp * 4
               + tm * hp * 4 + 2 * 8 * hp * 4)
    conv1 = pl.pallas_call(
        functools.partial(_conv1_kernel, tm=tm, n_real=n_real),
        grid=(num_tiles,),
        in_specs=[
            pl.BlockSpec((tm, np_), lambda i: (i, 0)),   # A row tile (streamed)
            pl.BlockSpec((np_, fp), lambda i: (0, 0)),   # x (resident)
            pl.BlockSpec((fp, hp), lambda i: (0, 0)),    # w1l
            pl.BlockSpec((1, hp), lambda i: (0, 0)),     # b1l
            pl.BlockSpec((fp, hp), lambda i: (0, 0)),    # w1r
        ],
        out_specs=[
            pl.BlockSpec((tm, hp), lambda i: (i, 0)),      # h_relu
            pl.BlockSpec((1, 8, hp), lambda i: (i, 0, 0)),  # per-tile sum(h)
            pl.BlockSpec((1, 8, hp), lambda i: (i, 0, 0)),  # per-tile sum(h^2)
        ],
        out_shape=[
            jax.ShapeDtypeStruct((np_, hp), f32),
            jax.ShapeDtypeStruct((num_tiles, 8, hp), f32),
            jax.ShapeDtypeStruct((num_tiles, 8, hp), f32),
        ],
        compiler_params=pltpu.CompilerParams(
            dimension_semantics=("parallel",),
            vmem_limit_bytes=_vmem_limit(bytes_a)),
    )
    h_relu, psum, psq = conv1(a_p, x_p, w1l, b1l, w1r)

    # ---------------- tiny BatchNorm finalize (batch statistics) --------------
    total = jnp.sum(psum[:, 0, :], axis=0)                    # (hp,)
    totsq = jnp.sum(psq[:, 0, :], axis=0)
    mu = total / n_real
    var = jnp.maximum(totsq / n_real - mu * mu, 0.0)          # biased variance
    inv_std = lax.rsqrt(var + BN_EPS)
    scale = (gamma[0] * inv_std)[None, :]                     # (1, hp)
    shift = (beta[0] - mu * gamma[0] * inv_std)[None, :]      # (1, hp)
    # TODO(synk): BatchNorm running-stat buffers are not updated; Dropout is
    # stochastic in train mode and is applied as identity (eval semantics).

    # ---------------- kernel BN: apply scale/shift, emit bf16 h ---------------
    bytes_bn = tm * hp * 4 + 2 * hp * 4 + tm * hp * 2
    bn_apply = pl.pallas_call(
        _bn_apply_kernel,
        grid=(num_tiles,),
        in_specs=[
            pl.BlockSpec((tm, hp), lambda i: (i, 0)),
            pl.BlockSpec((1, hp), lambda i: (0, 0)),
            pl.BlockSpec((1, hp), lambda i: (0, 0)),
        ],
        out_specs=pl.BlockSpec((tm, hp), lambda i: (i, 0)),
        out_shape=jax.ShapeDtypeStruct((np_, hp), bf16),
        compiler_params=pltpu.CompilerParams(
            dimension_semantics=("parallel",),
            vmem_limit_bytes=_vmem_limit(bytes_bn)),
    )
    h_bn = bn_apply(h_relu, scale, shift)

    # ---------------- kernel B: conv2 + fc ------------------------------------
    bytes_b = (tm * np_ * 2 + np_ * hp * 2 + 2 * hp * hp * 2 + hp * 4
               + hp * cp * 2 + cp * 4 + tm * cp * 4)
    conv2_fc = pl.pallas_call(
        functools.partial(_conv2_fc_kernel, tm=tm),
        grid=(num_tiles,),
        in_specs=[
            pl.BlockSpec((tm, np_), lambda i: (i, 0)),   # A row tile (streamed)
            pl.BlockSpec((np_, hp), lambda i: (0, 0)),   # h_bn (resident)
            pl.BlockSpec((hp, hp), lambda i: (0, 0)),    # w2l
            pl.BlockSpec((1, hp), lambda i: (0, 0)),     # b2l
            pl.BlockSpec((hp, hp), lambda i: (0, 0)),    # w2r
            pl.BlockSpec((hp, cp), lambda i: (0, 0)),    # wfc
            pl.BlockSpec((1, cp), lambda i: (0, 0)),     # bfc
        ],
        out_specs=pl.BlockSpec((tm, cp), lambda i: (i, 0)),
        out_shape=jax.ShapeDtypeStruct((np_, cp), f32),
        compiler_params=pltpu.CompilerParams(
            dimension_semantics=("parallel",),
            vmem_limit_bytes=_vmem_limit(bytes_b)),
    )
    out = conv2_fc(a_p, h_bn, w2l, b2l, w2r, wfc, bfc)

    return out[:n_real, :nclass]


# --------------------------------------------------------------------------
# Plain-JAX glue: parameter init + dense row-normalized adjacency
# --------------------------------------------------------------------------
def xavier_uniform(key, fan_in, fan_out):
    bound = (6.0 / (fan_in + fan_out)) ** 0.5
    # stored as [in, out] (transposed vs. PyTorch's [out, in]) for x @ W
    return jax.random.uniform(key, (fan_in, fan_out), jnp.float32, -bound, bound)


def build_adjacency(edge_index, num_nodes):
    src, dst = edge_index[0], edge_index[1]
    a = jnp.zeros((num_nodes, num_nodes), jnp.float32).at[dst, src].add(1.0)
    deg = jnp.sum(a, axis=1, keepdims=True)
    return a / jnp.maximum(deg, 1.0)   # rows with no in-edges stay zero (PyG mean aggr)


if __name__ == "__main__":
    nfeat, nhid, nclass = 16, 32, 4
    num_nodes, num_edges = 200, 800

    key = jax.random.PRNGKey(0)
    keys = jax.random.split(key, 8)

    x = jax.random.normal(keys[0], (num_nodes, nfeat), jnp.float32)
    edge_index = jax.random.randint(keys[1], (2, num_edges), 0, num_nodes)
    a_norm = build_adjacency(edge_index, num_nodes)

    params = {
        # conv1: lin_l (neighbor path, with bias) + lin_r (root path, no bias)
        "w1l": xavier_uniform(keys[2], nfeat, nhid),
        "b1l": jnp.zeros((1, nhid), jnp.float32),
        "w1r": xavier_uniform(keys[3], nfeat, nhid),
        # conv2
        "w2l": xavier_uniform(keys[4], nhid, nhid),
        "b2l": jnp.zeros((1, nhid), jnp.float32),
        "w2r": xavier_uniform(keys[5], nhid, nhid),
        # BatchNorm1d affine params (init gamma=1, beta=0)
        "gamma": jnp.ones((1, nhid), jnp.float32),
        "beta": jnp.zeros((1, nhid), jnp.float32),
        # fc
        "wfc": xavier_uniform(keys[6], nhid, nclass),
        "bfc": jnp.zeros((1, nclass), jnp.float32),
    }

    out = sage_forward(x, a_norm, params, tm=128)
    jax.block_until_ready(out)
    assert out.shape == (num_nodes, nclass)
    assert bool(jnp.all(jnp.isfinite(out)))
    print("KERNEL_OK")
</pallas_src>

<mosaic_0001>
module attributes {stable_mosaic.version = 11 : i64} {
  func.func @_conv1_kernel(%arg0: i32, %arg1: memref<128x256xbf16, #tpu.memory_space<vmem>>, %arg2: memref<256x128xbf16, #tpu.memory_space<vmem>>, %arg3: memref<128x128xbf16, #tpu.memory_space<vmem>>, %arg4: memref<1x128xf32, #tpu.memory_space<vmem>>, %arg5: memref<128x128xbf16, #tpu.memory_space<vmem>>, %arg6: memref<128x128xf32, #tpu.memory_space<vmem>>, %arg7: memref<1x8x128xf32, #tpu.memory_space<vmem>>, %arg8: memref<1x8x128xf32, #tpu.memory_space<vmem>>) attributes {dimension_semantics = [#tpu.dimension_semantics<parallel>], iteration_bounds = array<i64: 2>, scalar_prefetch = 0 : i64, scratch_operands = 0 : i64, tpu.core_type = #tpu.core_type<tc>, window_params = [{transform_indices = @transform_0, window_bounds = array<i64: 128, 256>}, {pipeline_mode = #tpu.pipeline_mode<synchronous>, transform_indices = @transform_1, window_bounds = array<i64: 256, 128>}, {pipeline_mode = #tpu.pipeline_mode<synchronous>, transform_indices = @transform_2, window_bounds = array<i64: 128, 128>}, {pipeline_mode = #tpu.pipeline_mode<synchronous>, transform_indices = @transform_3, window_bounds = array<i64: 1, 128>}, {pipeline_mode = #tpu.pipeline_mode<synchronous>, transform_indices = @transform_4, window_bounds = array<i64: 128, 128>}, {transform_indices = @transform_5, window_bounds = array<i64: 128, 128>}, {transform_indices = @transform_6, window_bounds = array<i64: 1, 8, 128>}, {transform_indices = @transform_7, window_bounds = array<i64: 1, 8, 128>}]} {
    %c128_i32 = arith.constant 128 : i32
    %0 = arith.muli %arg0, %c128_i32 : i32
    %1 = tpu.assume_multiple %0, 128 : i32
    %c0 = arith.constant 0 : index
    %c0_0 = arith.constant 0 : index
    %2 = vector.load %arg1[%c0, %c0_0] : memref<128x256xbf16, #tpu.memory_space<vmem>>, vector<128x256xbf16>
    %c0_1 = arith.constant 0 : index
    %c0_2 = arith.constant 0 : index
    %3 = vector.load %arg2[%c0_1, %c0_2] : memref<256x128xbf16, #tpu.memory_space<vmem>>, vector<256x128xbf16>
    %4 = arith.index_cast %1 : i32 to index
    %c0_3 = arith.constant 0 : index
    %5 = vector.load %arg2[%4, %c0_3] : memref<256x128xbf16, #tpu.memory_space<vmem>>, vector<128x128xbf16>
    %cst = arith.constant dense<0.000000e+00> : vector<128x128xf32>
    %6 = tpu.matmul %2, %3, %cst {dimension_numbers = #tpu.dot_dimension_numbers<[1], [0], [0], [1], [0, 0, 1, 1], [], []>} : vector<128x256xbf16>, vector<256x128xbf16>, vector<128x128xf32> -> vector<128x128xf32>
    %7 = arith.truncf %6 : vector<128x128xf32> to vector<128x128xbf16>
    %c0_4 = arith.constant 0 : index
    %c0_5 = arith.constant 0 : index
    %8 = vector.load %arg3[%c0_4, %c0_5] : memref<128x128xbf16, #tpu.memory_space<vmem>>, vector<128x128xbf16>
    %cst_6 = arith.constant dense<0.000000e+00> : vector<128x128xf32>
    %9 = tpu.matmul %7, %8, %cst_6 {dimension_numbers = #tpu.dot_dimension_numbers<[1], [0], [0], [1], [0, 0, 1, 1], [], []>} : vector<128x128xbf16>, vector<128x128xbf16>, vector<128x128xf32> -> vector<128x128xf32>
    %c0_7 = arith.constant 0 : index
    %c0_8 = arith.constant 0 : index
    %10 = vector.load %arg4[%c0_7, %c0_8] : memref<1x128xf32, #tpu.memory_space<vmem>>, vector<1x128xf32>
    %11 = vector.broadcast %10 : vector<1x128xf32> to vector<128x128xf32>
    %12 = arith.addf %9, %11 : vector<128x128xf32>
    %c0_9 = arith.constant 0 : index
    %c0_10 = arith.constant 0 : index
    %13 = vector.load %arg5[%c0_9, %c0_10] : memref<128x128xbf16, #tpu.memory_space<vmem>>, vector<128x128xbf16>
    %cst_11 = arith.constant dense<0.000000e+00> : vector<128x128xf32>
    %14 = tpu.matmul %5, %13, %cst_11 {dimension_numbers = #tpu.dot_dimension_numbers<[1], [0], [0], [1], [0, 0, 1, 1], [], []>} : vector<128x128xbf16>, vector<128x128xbf16>, vector<128x128xf32> -> vector<128x128xf32>
    %15 = arith.addf %12, %14 : vector<128x128xf32>
    %16 = arith.mulf %15, %15 : vector<128x128xf32>
    %cst_12 = arith.constant dense<0.000000e+00> : vector<128xf32>
    %17 = vector.multi_reduction <add>, %16, %cst_12 [1] : vector<128x128xf32> to vector<128xf32>
    %18 = vector.shape_cast %17 : vector<128xf32> to vector<128x1xf32>
    %cst_13 = arith.constant 1.000000e-24 : f32
    %19 = vector.broadcast %cst_13 : f32 to vector<128x1xf32>
    %20 = arith.maximumf %18, %19 : vector<128x1xf32>
    %21 = math.rsqrt %20 : vector<128x1xf32>
    %22 = vector.broadcast %21 : vector<128x1xf32> to vector<128x128xf32>
    %23 = arith.mulf %15, %22 : vector<128x128xf32>
    %cst_14 = arith.constant 0.000000e+00 : f32
    %24 = vector.broadcast %cst_14 : f32 to vector<128x128xf32>
    %25 = arith.maximumf %23, %24 : vector<128x128xf32>
    %26 = tpu.iota {dimensions = array<i32: 0>} : vector<128x1xi32>
    %27 = vector.broadcast %1 : i32 to vector<128x1xi32>
    %28 = arith.addi %27, %26 : vector<128x1xi32>
    %c200_i32 = arith.constant 200 : i32
    %29 = vector.broadcast %c200_i32 : i32 to vector<128x1xi32>
    %30 = arith.cmpi slt, %28, %29 : vector<128x1xi32>
    %cst_15 = arith.constant 0.000000e+00 : f32
    %31 = vector.shape_cast %30 : vector<128x1xi1> to vector<128x1xi1>
    %32 = vector.broadcast %31 : vector<128x1xi1> to vector<128x128xi1>
    %33 = vector.broadcast %cst_15 : f32 to vector<128x128xf32>
    %34 = arith.select %32, %25, %33 : vector<128x128xi1>, vector<128x128xf32>
    %c0_16 = arith.constant 0 : index
    %c0_17 = arith.constant 0 : index
    %35 = vector.load %arg6[%c0_16, %c0_17] : memref<128x128xf32, #tpu.memory_space<vmem>>, vector<128x128xf32>
    tpu.vector_store %arg6[%c0_16, %c0_17], %34 {strides = array<i32>} : memref<128x128xf32, #tpu.memory_space<vmem>>, vector<128x128xf32>,
    %cst_18 = arith.constant dense<0.000000e+00> : vector<128xf32>
    %36 = vector.multi_reduction <add>, %34, %cst_18 [0] : vector<128x128xf32> to vector<128xf32>
    %37 = vector.shape_cast %36 : vector<128xf32> to vector<1x128xf32>
    %38 = arith.mulf %34, %34 : vector<128x128xf32>
    %cst_19 = arith.constant dense<0.000000e+00> : vector<128xf32>
    %39 = vector.multi_reduction <add>, %38, %cst_19 [0] : vector<128x128xf32> to vector<128xf32>
    %40 = vector.shape_cast %39 : vector<128xf32> to vector<1x128xf32>
    %41 = vector.shape_cast %37 : vector<1x128xf32> to vector<1x1x128xf32>
    %42 = vector.broadcast %41 : vector<1x1x128xf32> to vector<1x8x128xf32>
    %c0_20 = arith.constant 0 : index
    %c0_21 = arith.constant 0 : index
    %c0_22 = arith.constant 0 : index
    %43 = vector.load %arg7[%c0_20, %c0_21, %c0_22] : memref<1x8x128xf32, #tpu.memory_space<vmem>>, vector<1x8x128xf32>
    tpu.vector_store %arg7[%c0_20, %c0_21, %c0_22], %42 {strides = array<i32>} : memref<1x8x128xf32, #tpu.memory_space<vmem>>, vector<1x8x128xf32>,
    %44 = vector.shape_cast %40 : vector<1x128xf32> to vector<1x1x128xf32>
    %45 = vector.broadcast %44 : vector<1x1x128xf32> to vector<1x8x128xf32>
    %c0_23 = arith.constant 0 : index
    %c0_24 = arith.constant 0 : index
    %c0_25 = arith.constant 0 : index
    %46 = vector.load %arg8[%c0_23, %c0_24, %c0_25] : memref<1x8x128xf32, #tpu.memory_space<vmem>>, vector<1x8x128xf32>
    tpu.vector_store %arg8[%c0_23, %c0_24, %c0_25], %45 {strides = array<i32>} : memref<1x8x128xf32, #tpu.memory_space<vmem>>, vector<1x8x128xf32>,
    return
  }
  func.func @transform_0(%arg0: i32) -> (i32, i32) {
    %c0_i32 = arith.constant 0 : i32
    %c0_i32_0 = arith.constant 0 : i32
    return %arg0, %c0_i32 : i32, i32
  }
  func.func @transform_1(%arg0: i32) -> (i32, i32) {
    %c0_i32 = arith.constant 0 : i32
    %c0_i32_0 = arith.constant 0 : i32
    %c0_i32_1 = arith.constant 0 : i32
    return %c0_i32, %c0_i32_0 : i32, i32
  }
  func.func @transform_2(%arg0: i32) -> (i32, i32) {
    %c0_i32 = arith.constant 0 : i32
    %c0_i32_0 = arith.constant 0 : i32
    %c0_i32_1 = arith.constant 0 : i32
    return %c0_i32, %c0_i32_0 : i32, i32
  }
  func.func @transform_3(%arg0: i32) -> (i32, i32) {
    %c0_i32 = arith.constant 0 : i32
    %c0_i32_0 = arith.constant 0 : i32
    %c0_i32_1 = arith.constant 0 : i32
    return %c0_i32, %c0_i32_0 : i32, i32
  }
  func.func @transform_4(%arg0: i32) -> (i32, i32) {
    %c0_i32 = arith.constant 0 : i32
    %c0_i32_0 = arith.constant 0 : i32
    %c0_i32_1 = arith.constant 0 : i32
    return %c0_i32, %c0_i32_0 : i32, i32
  }
  func.func @transform_5(%arg0: i32) -> (i32, i32) {
    %c0_i32 = arith.constant 0 : i32
    %c0_i32_0 = arith.constant 0 : i32
    return %arg0, %c0_i32 : i32, i32
  }
  func.func @transform_6(%arg0: i32) -> (i32, i32, i32) {
    %c0_i32 = arith.constant 0 : i32
    %c0_i32_0 = arith.constant 0 : i32
    %c0_i32_1 = arith.constant 0 : i32
    return %arg0, %c0_i32, %c0_i32_0 : i32, i32, i32
  }
  func.func @transform_7(%arg0: i32) -> (i32, i32, i32) {
    %c0_i32 = arith.constant 0 : i32
    %c0_i32_0 = arith.constant 0 : i32
    %c0_i32_1 = arith.constant 0 : i32
    return %arg0, %c0_i32, %c0_i32_0 : i32, i32, i32
  }
}

</mosaic_0001>

<llo_original>
// kernel: tpu_custom_call.1
$region0: #{tpu_custom_call.1}
  #allocation0 [shape = 'u32[]', space=smem, size = 0x4, offset = 0x4, fixed_abs, tag = 'smem constant byte address 0x4 - core index']
  #allocation1 [shape = 'u32[144,128]{1,0:T(1,128)}', space=vmem, size = 0x12000, scoped, tag = 'internal scratch']
  %s0 = inlined_call_operand.hbm [shape: bf16[256,256], index: 0, kind: input, shape index: {}]
  %s1 = inlined_call_operand.hbm [shape: bf16[256,128], index: 1, kind: input, shape index: {}]
  %s2 = inlined_call_operand.hbm [shape: bf16[128,128], index: 2, kind: input, shape index: {}]
  %s3 = inlined_call_operand.vmem [shape: f32[1,128], index: 3, kind: input, shape index: {}]
  %s4 = inlined_call_operand.hbm [shape: bf16[128,128], index: 4, kind: input, shape index: {}]
  %s5 = inlined_call_operand.hbm [shape: f32[256,128], index: 5, kind: output, shape index: {0}]
  %s6 = inlined_call_operand.hbm [shape: f32[2,8,128], index: 6, kind: output, shape index: {1}]
  %s7 = inlined_call_operand.hbm [shape: f32[2,8,128], index: 7, kind: output, shape index: {2}]
  %8 = xla_tuple %s5, %s6, %s7
  %s9 = sld [smem:[#allocation0]]
  $region85: #{tpu_custom_call.1} parent=0
    _
  %s11 = ssub.s32 1, %s9
  %s12 = scalar_select 0, %s11, %s9
  $region1: #{tpu_custom_call.1} parent=0
    #allocation2 [shape = 'u8[131072]{0}', space=vmem, size = 0x20000, scoped, tag = 'input window, operand 0']
    #allocation3 [shape = 's32[2]{0}', space=sflag, size = 0x8, scoped, tag = 'scoped memory for tpu_custom_call.1']
    #allocation4 [shape = 's32[2]{0}', space=sflag, size = 0x8, scoped, tag = 'scoped memory for tpu_custom_call.1']
    #allocation5 [shape = 'u8[65536]{0}', space=vmem, size = 0x10000, scoped, tag = 'input window, operand 1, single buffered']
    #allocation6 [shape = 's32[1]{0}', space=sflag, size = 0x4, scoped, tag = 'scoped memory for tpu_custom_call.1']
    #allocation7 [shape = 'u8[32768]{0}', space=vmem, size = 0x8000, scoped, tag = 'input window, operand 2, single buffered']
    #allocation8 [shape = 'u8[32768]{0}', space=vmem, size = 0x8000, scoped, tag = 'input window, operand 4, single buffered']
    #allocation9 [shape = 's32[1]{0}', space=sflag, size = 0x4, scoped, tag = 'scoped memory for tpu_custom_call.1']
    #allocation10 [shape = 'u8[131072]{0}', space=vmem, size = 0x20000, scoped, tag = 'output window, operand 0']
    #allocation11 [shape = 'u8[8192]{0}', space=vmem, size = 0x2000, scoped, tag = 'output window, operand 1']
    #allocation12 [shape = 's32[2]{0}', space=sflag, size = 0x8, scoped, tag = 'scoped memory for tpu_custom_call.1']
    #allocation13 [shape = 'u8[8192]{0}', space=vmem, size = 0x2000, scoped, tag = 'output window, operand 2']
    %13 = vsyncpa [#allocation3], 0
    %s14 = scalar_lea.sflag [#allocation3], 1
    %15 = vsyncpa %s14, 0
    %16 = vsyncpa [#allocation6], 0
    %17 = vsyncpa [#allocation9], 0
    %18 = vsyncpa [#allocation4], 0
    %s19 = scalar_lea.sflag [#allocation4], 1
    %20 = vsyncpa %s19, 0
    %21 = vsyncpa [#allocation12], 0
    %s22 = scalar_lea.sflag [#allocation12], 1
    %23 = vsyncpa %s22, 0
    loop: start=0, step=1, limit=4
    $region2: #{tpu_custom_call.1} parent=1 // loop_pre_header
      _
    $region3: #{tpu_custom_call.1} parent=1 // loop_header
      %s25 = sphi 0, %s29
      %p26 = scmp.ge.s32.totalorder %s25, 4
      %s35 = sphi 0, %s37
      %s38 = sphi 0, %s35
      %s39 = sphi 0, %s38
      %s55 = sphi 0, %s39
      %s59 = sphi 0, %s59
      %s61 = sphi 0, %s59
      %s62 = sphi 0, %s61
      %s76 = sphi 0, %s62
      %s80 = sphi 0, %s80
      %s82 = sphi 0, %s80
      %s83 = sphi 0, %s82
      %s97 = sphi 0, %s83
      %s101 = sphi 0, %s101
      %s103 = sphi 0, %s101
      %s104 = sphi 0, %s103
      %s118 = sphi 0, %s104
      %s122 = sphi 0, %s122
      %s124 = sphi 0, %s122
      %s125 = sphi 0, %s124
      %s139 = sphi 0, %s125
      %s145 = sphi 0, %s147
      %s148 = sphi 0, %s145
      %s149 = sphi 0, %s148
      %s165 = sphi 0, %s149
      %s171 = sphi 0, %s173
      %s174 = sphi 0, %s171
      %s175 = sphi 0, %s174
      %s191 = sphi 0, %s175
      %s197 = sphi 0, %s199
      %s200 = sphi 0, %s197
      %s201 = sphi 0, %s200
      %s217 = sphi 0, %s201
    $region4: #{tpu_custom_call.1} parent=1 // loop_header_branch
      %28 = sbr.rel (%p26) target = $region8
    $region5: #{tpu_custom_call.1} parent=1 // loop_body
      %s30 = ssub.s32 %s25, 1
      %s31 = ssub.s32 %s25, 2
      %s32 = sadd.s32 %s25, 1
      %s33 = ssub.s32 %s25, %s32
      %p34 = scmp.eq.s32.totalorder %s33, 0
      %s36 = sadd.s32 %s35, 1
      %s37 = scalar_select %p34, %s35, %s36
      %p40 = pneg %p34
      %p41 = scmp.eq.s32.totalorder %s25, 1
      %p42 = por %p40, %p41
      %p43 = scmp.ne.s32.totalorder %s35, %s38
      %p44 = scmp.eq.s32.totalorder %s25, 0
      %p45 = por %p43, %p44
      %p46 = scmp.ne.s32.totalorder %s35, %s38
      %p47 = scmp.eq.s32.totalorder %s30, 1
      %p48 = por %p46, %p47
      %p49 = scmp.ne.s32.totalorder %s38, %s39
      %p50 = scmp.eq.s32.totalorder %s30, 0
      %p51 = por %p49, %p50
      %p52 = scmp.ne.s32.totalorder %s38, %s39
      %p53 = scmp.eq.s32.totalorder %s31, 1
      %p54 = por %p52, %p53
      %p56 = scmp.ne.s32.totalorder %s39, %s55
      %p57 = scmp.eq.s32.totalorder %s31, 0
      %p58 = por %p56, %p57
      %s60 = sadd.s32 %s59, 1
      %p63 = scmp.eq.s32.totalorder %s25, 1
      %p64 = scmp.ne.s32.totalorder %s59, %s61
      %p65 = scmp.eq.s32.totalorder %s25, 0
      %p66 = por %p64, %p65
      %p67 = scmp.ne.s32.totalorder %s59, %s61
      %p68 = scmp.eq.s32.totalorder %s30, 1
      %p69 = por %p67, %p68
      %p70 = scmp.ne.s32.totalorder %s61, %s62
      %p71 = scmp.eq.s32.totalorder %s30, 0
      %p72 = por %p70, %p71
      %p73 = scmp.ne.s32.totalorder %s61, %s62
      %p74 = scmp.eq.s32.totalorder %s31, 1
      %p75 = por %p73, %p74
      %p77 = scmp.ne.s32.totalorder %s62, %s76
      %p78 = scmp.eq.s32.totalorder %s31, 0
      %p79 = por %p77, %p78
      %s81 = sadd.s32 %s80, 1
      %p84 = scmp.eq.s32.totalorder %s25, 1
      %p85 = scmp.ne.s32.totalorder %s80, %s82
      %p86 = scmp.eq.s32.totalorder %s25, 0
      %p87 = por %p85, %p86
      %p88 = scmp.ne.s32.totalorder %s80, %s82
      %p89 = scmp.eq.s32.totalorder %s30, 1
      %p90 = por %p88, %p89
      %p91 = scmp.ne.s32.totalorder %s82, %s83
      %p92 = scmp.eq.s32.totalorder %s30, 0
      %p93 = por %p91, %p92
      %p94 = scmp.ne.s32.totalorder %s82, %s83
      %p95 = scmp.eq.s32.totalorder %s31, 1
      %p96 = por %p94, %p95
      %p98 = scmp.ne.s32.totalorder %s83, %s97
      %p99 = scmp.eq.s32.totalorder %s31, 0
      %p100 = por %p98, %p99
      %s102 = sadd.s32 %s101, 1
      %p105 = scmp.eq.s32.totalorder %s25, 1
      %p106 = scmp.ne.s32.totalorder %s101, %s103
      %p107 = scmp.eq.s32.totalorder %s25, 0
      %p108 = por %p106, %p107
      %p109 = scmp.ne.s32.totalorder %s101, %s103
      %p110 = scmp.eq.s32.totalorder %s30, 1
      %p111 = por %p109, %p110
      %p112 = scmp.ne.s32.totalorder %s103, %s104
      %p113 = scmp.eq.s32.totalorder %s30, 0
      %p114 = por %p112, %p113
      %p115 = scmp.ne.s32.totalorder %s103, %s104
      %p116 = scmp.eq.s32.totalorder %s31, 1
      %p117 = por %p115, %p116
      %p119 = scmp.ne.s32.totalorder %s104, %s118
      %p120 = scmp.eq.s32.totalorder %s31, 0
      %p121 = por %p119, %p120
      %s123 = sadd.s32 %s122, 1
      %p126 = scmp.eq.s32.totalorder %s25, 1
      %p127 = scmp.ne.s32.totalorder %s122, %s124
      %p128 = scmp.eq.s32.totalorder %s25, 0
      %p129 = por %p127, %p128
      %p130 = scmp.ne.s32.totalorder %s122, %s124
      %p131 = scmp.eq.s32.totalorder %s30, 1
      %p132 = por %p130, %p131
      %p133 = scmp.ne.s32.totalorder %s124, %s125
      %p134 = scmp.eq.s32.totalorder %s30, 0
      %p135 = por %p133, %p134
      %p136 = scmp.ne.s32.totalorder %s124, %s125
      %p137 = scmp.eq.s32.totalorder %s31, 1
      %p138 = por %p136, %p137
      %p140 = scmp.ne.s32.totalorder %s125, %s139
      %p141 = scmp.eq.s32.totalorder %s31, 0
      %p142 = por %p140, %p141
      %s143 = ssub.s32 %s25, %s32
      %p144 = scmp.eq.s32.totalorder %s143, 0
      %s146 = sadd.s32 %s145, 1
      %s147 = scalar_select %p144, %s145, %s146
      %p150 = pneg %p144
      %p151 = scmp.eq.s32.totalorder %s25, 1
      %p152 = por %p150, %p151
      %p153 = scmp.ne.s32.totalorder %s145, %s148
      %p154 = scmp.eq.s32.totalorder %s25, 0
      %p155 = por %p153, %p154
      %p156 = scmp.ne.s32.totalorder %s145, %s148
      %p157 = scmp.eq.s32.totalorder %s30, 1
      %p158 = por %p156, %p157
      %p159 = scmp.ne.s32.totalorder %s148, %s149
      %p160 = scmp.eq.s32.totalorder %s30, 0
      %p161 = por %p159, %p160
      %p162 = scmp.ne.s32.totalorder %s148, %s149
      %p163 = scmp.eq.s32.totalorder %s31, 1
      %p164 = por %p162, %p163
      %p166 = scmp.ne.s32.totalorder %s149, %s165
      %p167 = scmp.eq.s32.totalorder %s31, 0
      %p168 = por %p166, %p167
      %s169 = ssub.s32 %s25, %s32
      %p170 = scmp.eq.s32.totalorder %s169, 0
      %s172 = sadd.s32 %s171, 1
      %s173 = scalar_select %p170, %s171, %s172
      %p176 = pneg %p170
      %p177 = scmp.eq.s32.totalorder %s25, 1
      %p178 = por %p176, %p177
      %p179 = scmp.ne.s32.totalorder %s171, %s174
      %p180 = scmp.eq.s32.totalorder %s25, 0
      %p181 = por %p179, %p180
      %p182 = scmp.ne.s32.totalorder %s171, %s174
      %p183 = scmp.eq.s32.totalorder %s30, 1
      %p184 = por %p182, %p183
      %p185 = scmp.ne.s32.totalorder %s174, %s175
      %p186 = scmp.eq.s32.totalorder %s30, 0
      %p187 = por %p185, %p186
      %p188 = scmp.ne.s32.totalorder %s174, %s175
      %p189 = scmp.eq.s32.totalorder %s31, 1
      %p190 = por %p188, %p189
      %p192 = scmp.ne.s32.totalorder %s175, %s191
      %p193 = scmp.eq.s32.totalorder %s31, 0
      %p194 = por %p192, %p193
      %s195 = ssub.s32 %s25, %s32
      %p196 = scmp.eq.s32.totalorder %s195, 0
      %s198 = sadd.s32 %s197, 1
      %s199 = scalar_select %p196, %s197, %s198
      %p202 = pneg %p196
      %p203 = scmp.eq.s32.totalorder %s25, 1
      %p204 = por %p202, %p203
      %p205 = scmp.ne.s32.totalorder %s197, %s200
      %p206 = scmp.eq.s32.totalorder %s25, 0
      %p207 = por %p205, %p206
      %p208 = scmp.ne.s32.totalorder %s197, %s200
      %p209 = scmp.eq.s32.totalorder %s30, 1
      %p210 = por %p208, %p209
      %p211 = scmp.ne.s32.totalorder %s200, %s201
      %p212 = scmp.eq.s32.totalorder %s30, 0
      %p213 = por %p211, %p212
      %p214 = scmp.ne.s32.totalorder %s200, %s201
      %p215 = scmp.eq.s32.totalorder %s31, 1
      %p216 = por %p214, %p215
      %p218 = scmp.ne.s32.totalorder %s201, %s217
      %p219 = scmp.eq.s32.totalorder %s31, 0
      %p220 = por %p218, %p219
      %p221 = scmp.le.s32.totalorder 1, %s25
      %p222 = scmp.lt.s32.totalorder %s25, 3
      %p223 = pnand %p221, %p222
      %p224 = pneg %p223
      // Predicated region
      $region9: #{tpu_custom_call.1} parent=5 // pred_check
        _
      $region10: #{tpu_custom_call.1} parent=5 // pred_check_branch
        %226 = sbr.rel (%p223) target = $region12
      $region11: #{tpu_custom_call.1} parent=5 // pred_region
        %s227 = ssub.s32 %s25, 1
        // Predicated region
        $region13: #{tpu_custom_call.1} parent=11 // pred_check
          %p228 = pneg %p72
        $region14: #{tpu_custom_call.1} parent=11 // pred_check_branch
          %230 = sbr.rel (%p228) target = $region16
        $region15: #{tpu_custom_call.1} parent=11 // pred_region
          %s232 = ssub.s32 2048, 2048
          %233 = vsyncadd [#allocation6], %s232
          %s234 = sshll.u32 [#allocation5], 4
          %s235 = int_to_ptr.vmem [resolvable:$true] %s234
          %240 = dma.hbm_to_vmem [thread:$0]  %s1, 2048, %s235, [#allocation6], 64, 64, 4
        $region16: #{tpu_custom_call.1} parent=11 // pred_fallthru
          _
        // Predicated region
        $region17: #{tpu_custom_call.1} parent=11 // pred_check
          %p241 = pneg %p93
        $region18: #{tpu_custom_call.1} parent=11 // pred_check_branch
          %243 = sbr.rel (%p241) target = $region20
        $region19: #{tpu_custom_call.1} parent=11 // pred_region
          %s245 = ssub.s32 1024, 1024
          %246 = vsyncadd [#allocation6], %s245
          %s247 = sshll.u32 [#allocation7], 4
          %s248 = int_to_ptr.vmem [resolvable:$true] %s247
          %253 = dma.hbm_to_vmem [thread:$0]  %s2, 1024, %s248, [#allocation6], 64, 64, 4
        $region20: #{tpu_custom_call.1} parent=11 // pred_fallthru
          _
        // Predicated region
        $region21: #{tpu_custom_call.1} parent=11 // pred_check
          %p254 = pneg %p114
        $region22: #{tpu_custom_call.1} parent=11 // pred_check_branch
          %256 = sbr.rel (%p254) target = $region24
        $region23: #{tpu_custom_call.1} parent=11 // pred_region
          _
        $region24: #{tpu_custom_call.1} parent=11 // pred_fallthru
          _
        // Predicated region
        $region25: #{tpu_custom_call.1} parent=11 // pred_check
          %p257 = pneg %p135
        $region26: #{tpu_custom_call.1} parent=11 // pred_check_branch
          %259 = sbr.rel (%p257) target = $region28
        $region27: #{tpu_custom_call.1} parent=11 // pred_region
          %s261 = ssub.s32 1024, 1024
          %262 = vsyncadd [#allocation9], %s261
          %s263 = sshll.u32 [#allocation8], 4
          %s264 = int_to_ptr.vmem [resolvable:$true] %s263
          %269 = dma.hbm_to_vmem [thread:$0]  %s4, 1024, %s264, [#allocation9], 64, 64, 4
        $region28: #{tpu_custom_call.1} parent=11 // pred_fallthru
          _
      $region12: #{tpu_custom_call.1} parent=5 // pred_fallthru
        _
      %p270 = scmp.lt.s32.totalorder %s25, 2
      // Predicated region
      $region29: #{tpu_custom_call.1} parent=5 // pred_check
        %p271 = pneg %p270
      $region30: #{tpu_custom_call.1} parent=5 // pred_check_branch
        %273 = sbr.rel (%p271) target = $region32
      $region31: #{tpu_custom_call.1} parent=5 // pred_region
        // Predicated region
        $region33: #{tpu_custom_call.1} parent=31 // pred_check
          %p274 = pneg %p45
        $region34: #{tpu_custom_call.1} parent=31 // pred_check_branch
          %276 = sbr.rel (%p274) target = $region36
        $region35: #{tpu_custom_call.1} parent=31 // pred_region
          %s277 = sand.u32 %s35, 1
          %s278 = scalar_lea.sflag [#allocation3], %s277
          %s279 = sand.u32 %s35, 1
          %s280 = smul.addr %s279, 128
          %s281 = scalar_lea.vmem [#allocation2], %s280
          %s282 = smul.u32 16, %s25
          %s284 = ssub.s32 2048, 2048
          %285 = vsyncadd %s278, %s284
          %s286 = smul.addr %s282, 2
          %s287 = smul.addr %s286, 64
          %s288 = scalar_lea.hbm %s0, %s287
          %s289 = sshll.u32 %s281, 4
          %s290 = int_to_ptr.vmem [resolvable:$true] %s289
          %295 = dma.hbm_to_vmem [thread:$0]  %s288, 2048, %s290, %s278, 128, 128, 8
        $region36: #{tpu_custom_call.1} parent=31 // pred_fallthru
          _
      $region32: #{tpu_custom_call.1} parent=5 // pred_fallthru
        _
      %p296 = scmp.le.s32.totalorder 1, %s25
      %p297 = scmp.lt.s32.totalorder %s25, 3
      %p298 = pnand %p296, %p297
      %p299 = pneg %p298
      // Predicated region
      $region37: #{tpu_custom_call.1} parent=5 // pred_check
        _
      $region38: #{tpu_custom_call.1} parent=5 // pred_check_branch
        %301 = sbr.rel (%p298) target = $region40
      $region39: #{tpu_custom_call.1} parent=5 // pred_region
        %s302 = ssub.s32 %s25, 1
        %s303 = sand.u32 %s38, 1
        %s304 = scalar_lea.sflag [#allocation3], %s303
        %s305 = sand.u32 %s38, 1
        %s306 = smul.addr %s305, 128
        %s307 = scalar_lea.vmem [#allocation2], %s306
        // Predicated region
        $region41: #{tpu_custom_call.1} parent=39 // pred_check
          %p308 = pneg %p51
        $region42: #{tpu_custom_call.1} parent=39 // pred_check_branch
          %310 = sbr.rel (%p308) target = $region44
        $region43: #{tpu_custom_call.1} parent=39 // pred_region
          %311 = dma.done %s304, 2048
        $region44: #{tpu_custom_call.1} parent=39 // pred_fallthru
          _
        // Predicated region
        $region45: #{tpu_custom_call.1} parent=39 // pred_check
          %p312 = pneg %p72
        $region46: #{tpu_custom_call.1} parent=39 // pred_check_branch
          %314 = sbr.rel (%p312) target = $region48
        $region47: #{tpu_custom_call.1} parent=39 // pred_region
          %315 = dma.done [#allocation6], 2048
        $region48: #{tpu_custom_call.1} parent=39 // pred_fallthru
          _
        // Predicated region
        $region49: #{tpu_custom_call.1} parent=39 // pred_check
          %p316 = pneg %p93
        $region50: #{tpu_custom_call.1} parent=39 // pred_check_branch
          %318 = sbr.rel (%p316) target = $region52
        $region51: #{tpu_custom_call.1} parent=39 // pred_region
          %319 = dma.done [#allocation6], 1024
        $region52: #{tpu_custom_call.1} parent=39 // pred_fallthru
          _
        // Predicated region
        $region53: #{tpu_custom_call.1} parent=39 // pred_check
          %p320 = pneg %p135
        $region54: #{tpu_custom_call.1} parent=39 // pred_check_branch
          %322 = sbr.rel (%p320) target = $region56
        $region55: #{tpu_custom_call.1} parent=39 // pred_region
          %323 = dma.done [#allocation9], 1024
        $region56: #{tpu_custom_call.1} parent=39 // pred_fallthru
          _
        %s324 = sand.u32 %s38, 1
        %s325 = scalar_lea.sflag [#allocation3], %s324
        %s326 = sand.u32 %s38, 1
        %s327 = smul.addr %s326, 128
        %s328 = scalar_lea.vmem [#allocation2], %s327
        %p329 = pneg %p51
        %p330 = pneg %p48
        %p331 = pneg %p72
        %p332 = pneg %p69
        %p333 = pneg %p93
        %p334 = pneg %p90
        %p335 = pneg %p114
        %p336 = pneg %p111
        %p337 = pneg %p135
        %p338 = pneg %p132
        %p339 = pneg %p161
        %p340 = pneg %p158
        %s341 = sand.u32 %s148, 1
        %s342 = scalar_lea.sflag [#allocation4], %s341
        %s343 = sand.u32 %s148, 1
        %s344 = smul.addr %s343, 128
        %s345 = scalar_lea.vmem [#allocation10], %s344
        %p346 = pneg %p187
        %p347 = pneg %p184
        %s348 = sand.u32 %s30, 1
        %s349 = scalar_lea.sflag [#allocation12], %s348
        %s350 = sand.u32 %s174, 1
        %s351 = smul.addr %s350, 8
        %s352 = scalar_lea.vmem [#allocation11], %s351
        %p353 = pneg %p213
        %p354 = pneg %p210
        %s355 = sand.u32 %s30, 1
        %s356 = scalar_lea.sflag [#allocation12], %s355
        %s357 = sand.u32 %s200, 1
        %s358 = smul.addr %s357, 8
        %s359 = scalar_lea.vmem [#allocation13], %s358
        %s360 = smul.u32 16, %s30
        %s361 = smul.u32 16, %s30
        %s363 = smul.u32 %s30, 128
        %v364 = vld [vmem:[%s307] sm:$0xff]
        %v365 = vld [vmem:[%s307 + $0x8] sm:$0xff]
        %v366 = vld [vmem:[%s307 + $0x10] sm:$0xff]
        %v367 = vld [vmem:[%s307 + $0x18] sm:$0xff]
        %v368 = vld [vmem:[%s307 + $0x20] sm:$0xff]
        %v369 = vld [vmem:[%s307 + $0x28] sm:$0xff]
        %v370 = vld [vmem:[%s307 + $0x30] sm:$0xff]
        %v371 = vld [vmem:[%s307 + $0x38] sm:$0xff]
        %v372 = vld [vmem:[%s307 + $0x40] sm:$0xff]
        %v373 = vld [vmem:[%s307 + $0x48] sm:$0xff]
        %v374 = vld [vmem:[%s307 + $0x50] sm:$0xff]
        %v375 = vld [vmem:[%s307 + $0x58] sm:$0xff]
        %v376 = vld [vmem:[%s307 + $0x60] sm:$0xff]
        %v377 = vld [vmem:[%s307 + $0x68] sm:$0xff]
        %v378 = vld [vmem:[%s307 + $0x70] sm:$0xff]
        %v379 = vld [vmem:[%s307 + $0x78] sm:$0xff]
        %v380 = vld [vmem:[#allocation5] sm:$0xf]
        %v381 = vld [vmem:[#allocation5 + $0x4] sm:$0xf]
        %v382 = vld [vmem:[#allocation5 + $0x8] sm:$0xf]
        %v383 = vld [vmem:[#allocation5 + $0xc] sm:$0xf]
        %v384 = vld [vmem:[#allocation5 + $0x10] sm:$0xf]
        %v385 = vld [vmem:[#allocation5 + $0x14] sm:$0xf]
        %v386 = vld [vmem:[#allocation5 + $0x18] sm:$0xf]
        %v387 = vld [vmem:[#allocation5 + $0x1c] sm:$0xf]
        %v388 = vld [vmem:[#allocation5 + $0x20] sm:$0xf]
        %v389 = vld [vmem:[#allocation5 + $0x24] sm:$0xf]
        %v390 = vld [vmem:[#allocation5 + $0x28] sm:$0xf]
        %v391 = vld [vmem:[#allocation5 + $0x2c] sm:$0xf]
        %v392 = vld [vmem:[#allocation5 + $0x30] sm:$0xf]
        %v393 = vld [vmem:[#allocation5 + $0x34] sm:$0xf]
        %v394 = vld [vmem:[#allocation5 + $0x38] sm:$0xf]
        %v395 = vld [vmem:[#allocation5 + $0x3c] sm:$0xf]
        %v396 = vld [vmem:[#allocation5 + $0x40] sm:$0xf]
        %v397 = vld [vmem:[#allocation5 + $0x44] sm:$0xf]
        %v398 = vld [vmem:[#allocation5 + $0x48] sm:$0xf]
        %v399 = vld [vmem:[#allocation5 + $0x4c] sm:$0xf]
        %v400 = vld [vmem:[#allocation5 + $0x50] sm:$0xf]
        %v401 = vld [vmem:[#allocation5 + $0x54] sm:$0xf]
        %v402 = vld [vmem:[#allocation5 + $0x58] sm:$0xf]
        %v403 = vld [vmem:[#allocation5 + $0x5c] sm:$0xf]
        %v404 = vld [vmem:[#allocation5 + $0x60] sm:$0xf]
        %v405 = vld [vmem:[#allocation5 + $0x64] sm:$0xf]
        %v406 = vld [vmem:[#allocation5 + $0x68] sm:$0xf]
        %v407 = vld [vmem:[#allocation5 + $0x6c] sm:$0xf]
        %v408 = vld [vmem:[#allocation5 + $0x70] sm:$0xf]
        %v409 = vld [vmem:[#allocation5 + $0x74] sm:$0xf]
        %v410 = vld [vmem:[#allocation5 + $0x78] sm:$0xf]
        %v411 = vld [vmem:[#allocation5 + $0x7c] sm:$0xf]
        %s412 = sshra.s32 %s363, 3
        %s413 = sand.u32 %s363, 7
        %s414 = smul.addr %s412, 4
        %s415 = scalar_lea.vmem [#allocation5], %s414
        %v416 = vld [vmem:[%s415] sm:$0xf]
        %v417 = vld [vmem:[%s415 + $0x4] sm:$0xf]
        %v418 = vld [vmem:[%s415 + $0x8] sm:$0xf]
        %v419 = vld [vmem:[%s415 + $0xc] sm:$0xf]
        %v420 = vld [vmem:[%s415 + $0x10] sm:$0xf]
        %v421 = vld [vmem:[%s415 + $0x14] sm:$0xf]
        %v422 = vld [vmem:[%s415 + $0x18] sm:$0xf]
        %v423 = vld [vmem:[%s415 + $0x1c] sm:$0xf]
        %v424 = vld [vmem:[%s415 + $0x20] sm:$0xf]
        %v425 = vld [vmem:[%s415 + $0x24] sm:$0xf]
        %v426 = vld [vmem:[%s415 + $0x28] sm:$0xf]
        %v427 = vld [vmem:[%s415 + $0x2c] sm:$0xf]
        %v428 = vld [vmem:[%s415 + $0x30] sm:$0xf]
        %v429 = vld [vmem:[%s415 + $0x34] sm:$0xf]
        %v430 = vld [vmem:[%s415 + $0x38] sm:$0xf]
        %v431 = vld [vmem:[%s415 + $0x3c] sm:$0xf]
        %v448 = vunpack.c.l.b16 %v364
        %v449 = vunpack.c.h.b16 %v364
        %v450 = vunpack.c.l.b16 %v365
        %v451 = vunpack.c.h.b16 %v365
        %v452 = vunpack.c.l.b16 %v366
        %v453 = vunpack.c.h.b16 %v366
        %v454 = vunpack.c.l.b16 %v367
        %v455 = vunpack.c.h.b16 %v367
        %v456 = vunpack.c.l.b16 %v368
        %v457 = vunpack.c.h.b16 %v368
        %v458 = vunpack.c.l.b16 %v369
        %v459 = vunpack.c.h.b16 %v369
        %v460 = vunpack.c.l.b16 %v370
        %v461 = vunpack.c.h.b16 %v370
        %v462 = vunpack.c.l.b16 %v371
        %v463 = vunpack.c.h.b16 %v371
        %v464 = vunpack.c.l.b16 %v372
        %v465 = vunpack.c.h.b16 %v372
        %v466 = vunpack.c.l.b16 %v373
        %v467 = vunpack.c.h.b16 %v373
        %v468 = vunpack.c.l.b16 %v374
        %v469 = vunpack.c.h.b16 %v374
        %v470 = vunpack.c.l.b16 %v375
        %v471 = vunpack.c.h.b16 %v375
        %v472 = vunpack.c.l.b16 %v376
        %v473 = vunpack.c.h.b16 %v376
        %v474 = vunpack.c.l.b16 %v377
        %v475 = vunpack.c.h.b16 %v377
        %v476 = vunpack.c.l.b16 %v378
        %v477 = vunpack.c.h.b16 %v378
        %v478 = vunpack.c.l.b16 %v379
        %v479 = vunpack.c.h.b16 %v379
        %v480 = vpack.c.b16 %v450, %v448
        %v481 = vpack.c.b16 %v451, %v449
        %v482 = vpack.c.b16 %v454, %v452
        %v483 = vpack.c.b16 %v455, %v453
        %v484 = vpack.c.b16 %v458, %v456
        %v485 = vpack.c.b16 %v459, %v457
        %v486 = vpack.c.b16 %v462, %v460
        %v487 = vpack.c.b16 %v463, %v461
        %v488 = vpack.c.b16 %v466, %v464
        %v489 = vpack.c.b16 %v467, %v465
        %v490 = vpack.c.b16 %v470, %v468
        %v491 = vpack.c.b16 %v471, %v469
        %v492 = vpack.c.b16 %v474, %v472
        %v493 = vpack.c.b16 %v475, %v473
        %v494 = vpack.c.b16 %v478, %v476
        %v495 = vpack.c.b16 %v479, %v477
        %v544 = vunpack.c.l.b16 %v380
        %v545 = vunpack.c.l.b16 %v381
        %v546 = vunpack.c.l.b16 %v382
        %v547 = vunpack.c.l.b16 %v383
        %v548 = vunpack.c.l.b16 %v384
        %v549 = vunpack.c.l.b16 %v385
        %v550 = vunpack.c.l.b16 %v386
        %v551 = vunpack.c.l.b16 %v387
        %v552 = vunpack.c.l.b16 %v388
        %v553 = vunpack.c.l.b16 %v389
        %v554 = vunpack.c.l.b16 %v390
        %v555 = vunpack.c.l.b16 %v391
        %v556 = vunpack.c.l.b16 %v392
        %v557 = vunpack.c.l.b16 %v393
        %v558 = vunpack.c.l.b16 %v394
        %v559 = vunpack.c.l.b16 %v395
        %v560 = vunpack.c.l.b16 %v396
        %v561 = vunpack.c.l.b16 %v397
        %v562 = vunpack.c.l.b16 %v398
        %v563 = vunpack.c.l.b16 %v399
        %v564 = vunpack.c.l.b16 %v400
        %v565 = vunpack.c.l.b16 %v401
        %v566 = vunpack.c.l.b16 %v402
        %v567 = vunpack.c.l.b16 %v403
        %v568 = vunpack.c.l.b16 %v404
        %v569 = vunpack.c.l.b16 %v405
        %v570 = vunpack.c.l.b16 %v406
        %v571 = vunpack.c.l.b16 %v407
        %v572 = vunpack.c.l.b16 %v408
        %v573 = vunpack.c.l.b16 %v409
        %v574 = vunpack.c.l.b16 %v410
        %v575 = vunpack.c.l.b16 %v411
        %v576 = vpack.c.b16 %v545, %v544
        %v577 = vpack.c.b16 %v547, %v546
        %v578 = vpack.c.b16 %v549, %v548
        %v579 = vpack.c.b16 %v551, %v550
        %v580 = vpack.c.b16 %v553, %v552
        %v581 = vpack.c.b16 %v555, %v554
        %v582 = vpack.c.b16 %v557, %v556
        %v583 = vpack.c.b16 %v559, %v558
        %v584 = vpack.c.b16 %v561, %v560
        %v585 = vpack.c.b16 %v563, %v562
        %v586 = vpack.c.b16 %v565, %v564
        %v587 = vpack.c.b16 %v567, %v566
        %v588 = vpack.c.b16 %v569, %v568
        %v589 = vpack.c.b16 %v571, %v570
        %v590 = vpack.c.b16 %v573, %v572
        %v591 = vpack.c.b16 %v575, %v574
        %608 = vmatprep.subr.bf16.mxu0 0
        %609 = vmatpush1.bf16.msra.mxu0 %v576
        %610 = vmatprep.subr.bf16.mxu0 0
        %611 = vmatpush1.bf16.msra.mxu0 %v577
        %612 = vmatprep.subr.bf16.mxu0 0
        %613 = vmatpush1.bf16.msra.mxu0 %v578
        %614 = vmatprep.subr.bf16.mxu0 0
        %615 = vmatpush1.bf16.msra.mxu0 %v579
        %616 = vmatprep.subr.bf16.mxu0 0
        %617 = vmatpush1.bf16.msra.mxu0 %v580
        %618 = vmatprep.subr.bf16.mxu0 0
        %619 = vmatpush1.bf16.msra.mxu0 %v581
        %620 = vmatprep.subr.bf16.mxu0 0
        %621 = vmatpush1.bf16.msra.mxu0 %v582
        %622 = vmatprep.subr.bf16.mxu0 0
        %623 = vmatpush1.bf16.msra.mxu0 %v583
        %624 = vmatprep.subr.bf16.mxu0 0
        %625 = vmatpush1.bf16.msra.mxu0 %v584
        %626 = vmatprep.subr.bf16.mxu0 0
        %627 = vmatpush1.bf16.msra.mxu0 %v585
        %628 = vmatprep.subr.bf16.mxu0 0
        %629 = vmatpush1.bf16.msra.mxu0 %v586
        %630 = vmatprep.subr.bf16.mxu0 0
        %631 = vmatpush1.bf16.msra.mxu0 %v587
        %632 = vmatprep.subr.bf16.mxu0 0
        %633 = vmatpush1.bf16.msra.mxu0 %v588
        %634 = vmatprep.subr.bf16.mxu0 0
        %635 = vmatpush1.bf16.msra.mxu0 %v589
        %636 = vmatprep.subr.bf16.mxu0 0
        %637 = vmatpush1.bf16.msra.mxu0 %v590
        %638 = vmatprep.subr.bf16.mxu0 0
        %639 = vmatpush1.bf16.msra.mxu0 %v591
        %640 = vmatprep.mubr.bf16.mxu0 %v481
        %641 = vmatmul.mubr.bf16.gmra.mrb[0].mxu0 %v480
        %v642 = vpop.f32.mrb[0].mxu0
        %v643 = vadd.f32 0.0, %v642
        %v644 = vpop.f32.mrb[0].mxu0
        %v645 = vpop.f32.mrb[0].mxu0
        %v646 = vadd.f32 0.0, %v645
        %v647 = vpop.f32.mrb[0].mxu0
        %648 = vmatprep.mubr.bf16.mxu0 %v483
        %649 = vmatmul.mubr.bf16.gmra.mrb[0].mxu0 %v482
        %v650 = vpop.f32.mrb[0].mxu0
        %v651 = vadd.f32 0.0, %v650
        %v652 = vpop.f32.mrb[0].mxu0
        %v653 = vpop.f32.mrb[0].mxu0
        %v654 = vadd.f32 0.0, %v653
        %v655 = vpop.f32.mrb[0].mxu0
        %656 = vmatprep.mubr.bf16.mxu0 %v485
        %657 = vmatmul.mubr.bf16.gmra.mrb[0].mxu0 %v484
        %v658 = vpop.f32.mrb[0].mxu0
        %v659 = vadd.f32 0.0, %v658
        %v660 = vpop.f32.mrb[0].mxu0
        %v661 = vpop.f32.mrb[0].mxu0
        %v662 = vadd.f32 0.0, %v661
        %v663 = vpop.f32.mrb[0].mxu0
        %664 = vmatprep.mubr.bf16.mxu0 %v487
        %665 = vmatmul.mubr.bf16.gmra.mrb[0].mxu0 %v486
        %v666 = vpop.f32.mrb[0].mxu0
        %v667 = vadd.f32 0.0, %v666
        %v668 = vpop.f32.mrb[0].mxu0
        %v669 = vpop.f32.mrb[0].mxu0
        %v670 = vadd.f32 0.0, %v669
        %v671 = vpop.f32.mrb[0].mxu0
        %672 = vmatprep.mubr.bf16.mxu0 %v489
        %673 = vmatmul.mubr.bf16.gmra.mrb[0].mxu0 %v488
        %v674 = vpop.f32.mrb[0].mxu0
        %v675 = vadd.f32 0.0, %v674
        %v676 = vpop.f32.mrb[0].mxu0
        %v677 = vpop.f32.mrb[0].mxu0
        %v678 = vadd.f32 0.0, %v677
        %v679 = vpop.f32.mrb[0].mxu0
        %680 = vmatprep.mubr.bf16.mxu0 %v491
        %681 = vmatmul.mubr.bf16.gmra.mrb[0].mxu0 %v490
        %v682 = vpop.f32.mrb[0].mxu0
        %v683 = vadd.f32 0.0, %v682
        %v684 = vpop.f32.mrb[0].mxu0
        %v685 = vpop.f32.mrb[0].mxu0
        %v686 = vadd.f32 0.0, %v685
        %v687 = vpop.f32.mrb[0].mxu0
        %688 = vmatprep.mubr.bf16.mxu0 %v493
        %689 = vmatmul.mubr.bf16.gmra.mrb[0].mxu0 %v492
        %v690 = vpop.f32.mrb[0].mxu0
        %v691 = vadd.f32 0.0, %v690
        %v692 = vpop.f32.mrb[0].mxu0
        %v693 = vpop.f32.mrb[0].mxu0
        %v694 = vadd.f32 0.0, %v693
        %v695 = vpop.f32.mrb[0].mxu0
        %696 = vmatprep.mubr.bf16.mxu0 %v495
        %697 = vmatmul.mubr.bf16.gmra.mrb[0].mxu0 %v494
        %v698 = vpop.f32.mrb[0].mxu0
        %v699 = vadd.f32 0.0, %v698
        %v700 = vpop.f32.mrb[0].mxu0
        %v701 = vpop.f32.mrb[0].mxu0
        %v702 = vadd.f32 0.0, %v701
        %v703 = vpop.f32.mrb[0].mxu0
        %704 = vdwg.mxu0
        %v705 = vpack.c.bf16 %v646, %v643
        %v706 = vpack.c.bf16 %v654, %v651
        %v707 = vpack.c.bf16 %v662, %v659
        %v708 = vpack.c.bf16 %v670, %v667
        %v709 = vpack.c.bf16 %v678, %v675
        %v710 = vpack.c.bf16 %v686, %v683
        %v711 = vpack.c.bf16 %v694, %v691
        %v712 = vpack.c.bf16 %v702, %v699
        %v713 = vld [vmem:[#allocation7] sm:$0xf]
        %v714 = vld [vmem:[#allocation7 + $0x4] sm:$0xf]
        %v715 = vld [vmem:[#allocation7 + $0x8] sm:$0xf]
        %v716 = vld [vmem:[#allocation7 + $0xc] sm:$0xf]
        %v717 = vld [vmem:[#allocation7 + $0x10] sm:$0xf]
        %v718 = vld [vmem:[#allocation7 + $0x14] sm:$0xf]
        %v719 = vld [vmem:[#allocation7 + $0x18] sm:$0xf]
        %v720 = vld [vmem:[#allocation7 + $0x1c] sm:$0xf]
        %v721 = vld [vmem:[#allocation7 + $0x20] sm:$0xf]
        %v722 = vld [vmem:[#allocation7 + $0x24] sm:$0xf]
        %v723 = vld [vmem:[#allocation7 + $0x28] sm:$0xf]
        %v724 = vld [vmem:[#allocation7 + $0x2c] sm:$0xf]
        %v725 = vld [vmem:[#allocation7 + $0x30] sm:$0xf]
        %v726 = vld [vmem:[#allocation7 + $0x34] sm:$0xf]
        %v727 = vld [vmem:[#allocation7 + $0x38] sm:$0xf]
        %v728 = vld [vmem:[#allocation7 + $0x3c] sm:$0xf]
        %v729 = vld [vmem:[%s3] sm:$0x1]
        %v731 = vlaneseq
        %v732 = vshrl.u32 %v731, 7
        %v733 = vsub.s32 0, %v732
        %v734 = vrot.slane %v729, %v733
        %v752 = vunpack.c.l.b16 %v713
        %v753 = vunpack.c.l.b16 %v714
        %v754 = vunpack.c.l.b16 %v715
        %v755 = vunpack.c.l.b16 %v716
        %v756 = vunpack.c.l.b16 %v717
        %v757 = vunpack.c.l.b16 %v718
        %v758 = vunpack.c.l.b16 %v719
        %v759 = vunpack.c.l.b16 %v720
        %v760 = vunpack.c.l.b16 %v721
        %v761 = vunpack.c.l.b16 %v722
        %v762 = vunpack.c.l.b16 %v723
        %v763 = vunpack.c.l.b16 %v724
        %v764 = vunpack.c.l.b16 %v725
        %v765 = vunpack.c.l.b16 %v726
        %v766 = vunpack.c.l.b16 %v727
        %v767 = vunpack.c.l.b16 %v728
        %v768 = vpack.c.b16 %v753, %v752
        %v769 = vpack.c.b16 %v755, %v754
        %v770 = vpack.c.b16 %v757, %v756
        %v771 = vpack.c.b16 %v759, %v758
        %v772 = vpack.c.b16 %v761, %v760
        %v773 = vpack.c.b16 %v763, %v762
        %v774 = vpack.c.b16 %v765, %v764
        %v775 = vpack.c.b16 %v767, %v766
        %784 = vmatprep.subr.bf16.mxu0 0
        %785 = vmatpush1.bf16.msra.mxu0 %v768
        %786 = vmatprep.subr.bf16.mxu0 0
        %787 = vmatpush1.bf16.msra.mxu0 %v769
        %788 = vmatprep.subr.bf16.mxu0 0
        %789 = vmatpush1.bf16.msra.mxu0 %v770
        %790 = vmatprep.subr.bf16.mxu0 0
        %791 = vmatpush1.bf16.msra.mxu0 %v771
        %792 = vmatprep.subr.bf16.mxu0 0
        %793 = vmatpush1.bf16.msra.mxu0 %v772
        %794 = vmatprep.subr.bf16.mxu0 0
        %795 = vmatpush1.bf16.msra.mxu0 %v773
        %796 = vmatprep.subr.bf16.mxu0 0
        %797 = vmatpush1.bf16.msra.mxu0 %v774
        %798 = vmatprep.subr.bf16.mxu0 0
        %799 = vmatpush1.bf16.msra.mxu0 %v775
        %800 = vmatprep.subr.bf16.mxu0 0
        %801 = vmatpush1.bf16.msra.mxu0 0
        %802 = vmatprep.subr.bf16.mxu0 0
        %803 = vmatpush1.bf16.msra.mxu0 0
        %804 = vmatprep.subr.bf16.mxu0 0
        %805 = vmatpush1.bf16.msra.mxu0 0
        %806 = vmatprep.subr.bf16.mxu0 0
        %807 = vmatpush1.bf16.msra.mxu0 0
        %808 = vmatprep.subr.bf16.mxu0 0
        %809 = vmatpush1.bf16.msra.mxu0 0
        %810 = vmatprep.subr.bf16.mxu0 0
        %811 = vmatpush1.bf16.msra.mxu0 0
        %812 = vmatprep.subr.bf16.mxu0 0
        %813 = vmatpush1.bf16.msra.mxu0 0
        %814 = vmatprep.subr.bf16.mxu0 0
        %815 = vmatpush1.bf16.msra.mxu0 0
        %816 = vmatprep.mubr.bf16.mxu0 0
        %817 = vmatmul.mubr.bf16.gmra.mrb[0].mxu0 %v705
        %v818 = vpop.f32.mrb[0].mxu0
        %v819 = vadd.f32 %v734, %v818
        %v820 = vpop.f32.mrb[0].mxu0
        %v821 = vpop.f32.mrb[0].mxu0
        %v822 = vadd.f32 %v734, %v821
        %v823 = vpop.f32.mrb[0].mxu0
        %824 = vmatprep.mubr.bf16.mxu0 0
        %825 = vmatmul.mubr.bf16.gmra.mrb[0].mxu0 %v706
        %v826 = vpop.f32.mrb[0].mxu0
        %v827 = vadd.f32 %v734, %v826
        %v828 = vpop.f32.mrb[0].mxu0
        %v829 = vpop.f32.mrb[0].mxu0
        %v830 = vadd.f32 %v734, %v829
        %v831 = vpop.f32.mrb[0].mxu0
        %832 = vmatprep.mubr.bf16.mxu0 0
        %833 = vmatmul.mubr.bf16.gmra.mrb[0].mxu0 %v707
        %v834 = vpop.f32.mrb[0].mxu0
        %v835 = vadd.f32 %v734, %v834
        %v836 = vpop.f32.mrb[0].mxu0
        %v837 = vpop.f32.mrb[0].mxu0
        %v838 = vadd.f32 %v734, %v837
        %v839 = vpop.f32.mrb[0].mxu0
        %840 = vmatprep.mubr.bf16.mxu0 0
        %841 = vmatmul.mubr.bf16.gmra.mrb[0].mxu0 %v708
        %v842 = vpop.f32.mrb[0].mxu0
        %v843 = vadd.f32 %v734, %v842
        %v844 = vpop.f32.mrb[0].mxu0
        %v845 = vpop.f32.mrb[0].mxu0
        %v846 = vadd.f32 %v734, %v845
        %v847 = vpop.f32.mrb[0].mxu0
        %848 = vmatprep.mubr.bf16.mxu0 0
        %849 = vmatmul.mubr.bf16.gmra.mrb[0].mxu0 %v709
        %v850 = vpop.f32.mrb[0].mxu0
        %v851 = vadd.f32 %v734, %v850
        %v852 = vpop.f32.mrb[0].mxu0
        %v853 = vpop.f32.mrb[0].mxu0
        %v854 = vadd.f32 %v734, %v853
        %v855 = vpop.f32.mrb[0].mxu0
        %856 = vmatprep.mubr.bf16.mxu0 0
        %857 = vmatmul.mubr.bf16.gmra.mrb[0].mxu0 %v710
        %v858 = vpop.f32.mrb[0].mxu0
        %v859 = vadd.f32 %v734, %v858
        %v860 = vpop.f32.mrb[0].mxu0
        %v861 = vpop.f32.mrb[0].mxu0
        %v862 = vadd.f32 %v734, %v861
        %v863 = vpop.f32.mrb[0].mxu0
        %864 = vmatprep.mubr.bf16.mxu0 0
        %865 = vmatmul.mubr.bf16.gmra.mrb[0].mxu0 %v711
        %v866 = vpop.f32.mrb[0].mxu0
        %v867 = vadd.f32 %v734, %v866
        %v868 = vpop.f32.mrb[0].mxu0
        %v869 = vpop.f32.mrb[0].mxu0
        %v870 = vadd.f32 %v734, %v869
        %v871 = vpop.f32.mrb[0].mxu0
        %872 = vmatprep.mubr.bf16.mxu0 0
        %873 = vmatmul.mubr.bf16.gmra.mrb[0].mxu0 %v712
        %v874 = vpop.f32.mrb[0].mxu0
        %v875 = vadd.f32 %v734, %v874
        %v876 = vpop.f32.mrb[0].mxu0
        %v877 = vpop.f32.mrb[0].mxu0
        %v878 = vadd.f32 %v734, %v877
        %v879 = vpop.f32.mrb[0].mxu0
        %880 = vdwg.mxu0
        %v881 = vld [vmem:[#allocation8] sm:$0xf]
        %v882 = vld [vmem:[#allocation8 + $0x4] sm:$0xf]
        %v883 = vld [vmem:[#allocation8 + $0x8] sm:$0xf]
        %v884 = vld [vmem:[#allocation8 + $0xc] sm:$0xf]
        %v885 = vld [vmem:[#allocation8 + $0x10] sm:$0xf]
        %v886 = vld [vmem:[#allocation8 + $0x14] sm:$0xf]
        %v887 = vld [vmem:[#allocation8 + $0x18] sm:$0xf]
        %v888 = vld [vmem:[#allocation8 + $0x1c] sm:$0xf]
        %v889 = vld [vmem:[#allocation8 + $0x20] sm:$0xf]
        %v890 = vld [vmem:[#allocation8 + $0x24] sm:$0xf]
        %v891 = vld [vmem:[#allocation8 + $0x28] sm:$0xf]
        %v892 = vld [vmem:[#allocation8 + $0x2c] sm:$0xf]
        %v893 = vld [vmem:[#allocation8 + $0x30] sm:$0xf]
        %v894 = vld [vmem:[#allocation8 + $0x34] sm:$0xf]
        %v895 = vld [vmem:[#allocation8 + $0x38] sm:$0xf]
        %v896 = vld [vmem:[#allocation8 + $0x3c] sm:$0xf]
        %v913 = vunpack.c.l.b16 %v416
        %v914 = vunpack.c.l.b16 %v417
        %v915 = vunpack.c.l.b16 %v418
        %v916 = vunpack.c.l.b16 %v419
        %v917 = vunpack.c.l.b16 %v420
        %v918 = vunpack.c.l.b16 %v421
        %v919 = vunpack.c.l.b16 %v422
        %v920 = vunpack.c.l.b16 %v423
        %v921 = vunpack.c.l.b16 %v424
        %v922 = vunpack.c.l.b16 %v425
        %v923 = vunpack.c.l.b16 %v426
        %v924 = vunpack.c.l.b16 %v427
        %v925 = vunpack.c.l.b16 %v428
        %v926 = vunpack.c.l.b16 %v429
        %v927 = vunpack.c.l.b16 %v430
        %v928 = vunpack.c.l.b16 %v431
        %v929 = vpack.c.b16 %v914, %v913
        %v930 = vpack.c.b16 %v916, %v915
        %v931 = vpack.c.b16 %v918, %v917
        %v932 = vpack.c.b16 %v920, %v919
        %v933 = vpack.c.b16 %v922, %v921
        %v934 = vpack.c.b16 %v924, %v923
        %v935 = vpack.c.b16 %v926, %v925
        %v936 = vpack.c.b16 %v928, %v927
        %v961 = vunpack.c.l.b16 %v881
        %v962 = vunpack.c.l.b16 %v882
        %v963 = vunpack.c.l.b16 %v883
        %v964 = vunpack.c.l.b16 %v884
        %v965 = vunpack.c.l.b16 %v885
        %v966 = vunpack.c.l.b16 %v886
        %v967 = vunpack.c.l.b16 %v887
        %v968 = vunpack.c.l.b16 %v888
        %v969 = vunpack.c.l.b16 %v889
        %v970 = vunpack.c.l.b16 %v890
        %v971 = vunpack.c.l.b16 %v891
        %v972 = vunpack.c.l.b16 %v892
        %v973 = vunpack.c.l.b16 %v893
        %v974 = vunpack.c.l.b16 %v894
        %v975 = vunpack.c.l.b16 %v895
        %v976 = vunpack.c.l.b16 %v896
        %v977 = vpack.c.b16 %v962, %v961
        %v978 = vpack.c.b16 %v964, %v963
        %v979 = vpack.c.b16 %v966, %v965
        %v980 = vpack.c.b16 %v968, %v967
        %v981 = vpack.c.b16 %v970, %v969
        %v982 = vpack.c.b16 %v972, %v971
        %v983 = vpack.c.b16 %v974, %v973
        %v984 = vpack.c.b16 %v976, %v975
        %993 = vmatprep.subr.bf16.mxu0 0
        %994 = vmatpush1.bf16.msra.mxu0 %v977
        %995 = vmatprep.subr.bf16.mxu0 0
        %996 = vmatpush1.bf16.msra.mxu0 %v978
        %997 = vmatprep.subr.bf16.mxu0 0
        %998 = vmatpush1.bf16.msra.mxu0 %v979
        %999 = vmatprep.subr.bf16.mxu0 0
        %1000 = vmatpush1.bf16.msra.mxu0 %v980
        %1001 = vmatprep.subr.bf16.mxu0 0
        %1002 = vmatpush1.bf16.msra.mxu0 %v981
        %1003 = vmatprep.subr.bf16.mxu0 0
        %1004 = vmatpush1.bf16.msra.mxu0 %v982
        %1005 = vmatprep.subr.bf16.mxu0 0
        %1006 = vmatpush1.bf16.msra.mxu0 %v983
        %1007 = vmatprep.subr.bf16.mxu0 0
        %1008 = vmatpush1.bf16.msra.mxu0 %v984
        %1009 = vmatprep.subr.bf16.mxu0 0
        %1010 = vmatpush1.bf16.msra.mxu0 0
        %1011 = vmatprep.subr.bf16.mxu0 0
        %1012 = vmatpush1.bf16.msra.mxu0 0
        %1013 = vmatprep.subr.bf16.mxu0 0
        %1014 = vmatpush1.bf16.msra.mxu0 0
        %1015 = vmatprep.subr.bf16.mxu0 0
        %1016 = vmatpush1.bf16.msra.mxu0 0
        %1017 = vmatprep.subr.bf16.mxu0 0
        %1018 = vmatpush1.bf16.msra.mxu0 0
        %1019 = vmatprep.subr.bf16.mxu0 0
        %1020 = vmatpush1.bf16.msra.mxu0 0
        %1021 = vmatprep.subr.bf16.mxu0 0
        %1022 = vmatpush1.bf16.msra.mxu0 0
        %1023 = vmatprep.subr.bf16.mxu0 0
        %1024 = vmatpush1.bf16.msra.mxu0 0
        %1025 = vmatprep.mubr.bf16.mxu0 0
        %1026 = vmatmul.mubr.bf16.gmra.mrb[0].mxu0 %v929
        %v1027 = vpop.f32.mrb[0].mxu0
        %v1028 = vadd.f32 0.0, %v1027
        %v1029 = vpop.f32.mrb[0].mxu0
        %v1030 = vpop.f32.mrb[0].mxu0
        %v1031 = vadd.f32 0.0, %v1030
        %v1032 = vpop.f32.mrb[0].mxu0
        %1033 = vmatprep.mubr.bf16.mxu0 0
        %1034 = vmatmul.mubr.bf16.gmra.mrb[0].mxu0 %v930
        %v1035 = vpop.f32.mrb[0].mxu0
        %v1036 = vadd.f32 0.0, %v1035
        %v1037 = vpop.f32.mrb[0].mxu0
        %v1038 = vpop.f32.mrb[0].mxu0
        %v1039 = vadd.f32 0.0, %v1038
        %v1040 = vpop.f32.mrb[0].mxu0
        %1041 = vmatprep.mubr.bf16.mxu0 0
        %1042 = vmatmul.mubr.bf16.gmra.mrb[0].mxu0 %v931
        %v1043 = vpop.f32.mrb[0].mxu0
        %v1044 = vadd.f32 0.0, %v1043
        %v1045 = vpop.f32.mrb[0].mxu0
        %v1046 = vpop.f32.mrb[0].mxu0
        %v1047 = vadd.f32 0.0, %v1046
        %v1048 = vpop.f32.mrb[0].mxu0
        %1049 = vmatprep.mubr.bf16.mxu0 0
        %1050 = vmatmul.mubr.bf16.gmra.mrb[0].mxu0 %v932
        %v1051 = vpop.f32.mrb[0].mxu0
        %v1052 = vadd.f32 0.0, %v1051
        %v1053 = vpop.f32.mrb[0].mxu0
        %v1054 = vpop.f32.mrb[0].mxu0
        %v1055 = vadd.f32 0.0, %v1054
        %v1056 = vpop.f32.mrb[0].mxu0
        %1057 = vmatprep.mubr.bf16.mxu0 0
        %1058 = vmatmul.mubr.bf16.gmra.mrb[0].mxu0 %v933
        %v1059 = vpop.f32.mrb[0].mxu0
        %v1060 = vadd.f32 0.0, %v1059
        %v1061 = vpop.f32.mrb[0].mxu0
        %v1062 = vpop.f32.mrb[0].mxu0
        %v1063 = vadd.f32 0.0, %v1062
        %v1064 = vpop.f32.mrb[0].mxu0
        %1065 = vmatprep.mubr.bf16.mxu0 0
        %1066 = vmatmul.mubr.bf16.gmra.mrb[0].mxu0 %v934
        %v1067 = vpop.f32.mrb[0].mxu0
        %v1068 = vadd.f32 0.0, %v1067
        %v1069 = vpop.f32.mrb[0].mxu0
        %v1070 = vpop.f32.mrb[0].mxu0
        %v1071 = vadd.f32 0.0, %v1070
        %v1072 = vpop.f32.mrb[0].mxu0
        %1073 = vmatprep.mubr.bf16.mxu0 0
        %1074 = vmatmul.mubr.bf16.gmra.mrb[0].mxu0 %v935
        %v1075 = vpop.f32.mrb[0].mxu0
        %v1076 = vadd.f32 0.0, %v1075
        %v1077 = vpop.f32.mrb[0].mxu0
        %v1078 = vpop.f32.mrb[0].mxu0
        %v1079 = vadd.f32 0.0, %v1078
        %v1080 = vpop.f32.mrb[0].mxu0
        %1081 = vmatprep.mubr.bf16.mxu0 0
        %1082 = vmatmul.mubr.bf16.gmra.mrb[0].mxu0 %v936
        %v1083 = vpop.f32.mrb[0].mxu0
        %v1084 = vadd.f32 0.0, %v1083
        %v1085 = vpop.f32.mrb[0].mxu0
        %v1086 = vpop.f32.mrb[0].mxu0
        %v1087 = vadd.f32 0.0, %v1086
        %v1088 = vpop.f32.mrb[0].mxu0
        %1089 = vdwg.mxu0
        %v1090 = vadd.f32 %v819, %v1028
        %v1091 = vadd.f32 %v822, %v1031
        %v1092 = vadd.f32 %v827, %v1036
        %v1093 = vadd.f32 %v830, %v1039
        %v1094 = vadd.f32 %v835, %v1044
        %v1095 = vadd.f32 %v838, %v1047
        %v1096 = vadd.f32 %v843, %v1052
        %v1097 = vadd.f32 %v846, %v1055
        %v1098 = vadd.f32 %v851, %v1060
        %v1099 = vadd.f32 %v854, %v1063
        %v1100 = vadd.f32 %v859, %v1068
        %v1101 = vadd.f32 %v862, %v1071
        %v1102 = vadd.f32 %v867, %v1076
        %v1103 = vadd.f32 %v870, %v1079
        %v1104 = vadd.f32 %v875, %v1084
        %v1105 = vadd.f32 %v878, %v1087
        %v1106 = vmul.f32 %v1090, %v1090
        %v1107 = vmul.f32 %v1091, %v1091
        %v1108 = vmul.f32 %v1092, %v1092
        %v1109 = vmul.f32 %v1093, %v1093
        %v1110 = vmul.f32 %v1094, %v1094
        %v1111 = vmul.f32 %v1095, %v1095
        %v1112 = vmul.f32 %v1096, %v1096
        %v1113 = vmul.f32 %v1097, %v1097
        %v1114 = vmul.f32 %v1098, %v1098
        %v1115 = vmul.f32 %v1099, %v1099
        %v1116 = vmul.f32 %v1100, %v1100
        %v1117 = vmul.f32 %v1101, %v1101
        %v1118 = vmul.f32 %v1102, %v1102
        %v1119 = vmul.f32 %v1103, %v1103
        %v1120 = vmul.f32 %v1104, %v1104
        %v1121 = vmul.f32 %v1105, %v1105
        %1122 = vadd.xlane.f32.xlu0 %v1106
        %v1123 = vpop.xlane.xlu0 %1122
        %1124 = vadd.xlane.f32.xlu0 %v1107
        %v1125 = vpop.xlane.xlu0 %1124
        %1126 = vadd.xlane.f32.xlu0 %v1108
        %v1127 = vpop.xlane.xlu0 %1126
        %1128 = vadd.xlane.f32.xlu0 %v1109
        %v1129 = vpop.xlane.xlu0 %1128
        %1130 = vadd.xlane.f32.xlu0 %v1110
        %v1131 = vpop.xlane.xlu0 %1130
        %1132 = vadd.xlane.f32.xlu0 %v1111
        %v1133 = vpop.xlane.xlu0 %1132
        %1134 = vadd.xlane.f32.xlu0 %v1112
        %v1135 = vpop.xlane.xlu0 %1134
        %1136 = vadd.xlane.f32.xlu0 %v1113
        %v1137 = vpop.xlane.xlu0 %1136
        %1138 = vadd.xlane.f32.xlu0 %v1114
        %v1139 = vpop.xlane.xlu0 %1138
        %1140 = vadd.xlane.f32.xlu0 %v1115
        %v1141 = vpop.xlane.xlu0 %1140
        %1142 = vadd.xlane.f32.xlu0 %v1116
        %v1143 = vpop.xlane.xlu0 %1142
        %1144 = vadd.xlane.f32.xlu0 %v1117
        %v1145 = vpop.xlane.xlu0 %1144
        %1146 = vadd.xlane.f32.xlu0 %v1118
        %v1147 = vpop.xlane.xlu0 %1146
        %1148 = vadd.xlane.f32.xlu0 %v1119
        %v1149 = vpop.xlane.xlu0 %1148
        %1150 = vadd.xlane.f32.xlu0 %v1120
        %v1151 = vpop.xlane.xlu0 %1150
        %1152 = vadd.xlane.f32.xlu0 %v1121
        %v1153 = vpop.xlane.xlu0 %1152
        %v1154 = vmax.f32 %v1123, 1e-24
        %v1155 = vmax.f32 %v1125, 1e-24
        %v1156 = vmax.f32 %v1127, 1e-24
        %v1157 = vmax.f32 %v1129, 1e-24
        %v1158 = vmax.f32 %v1131, 1e-24
        %v1159 = vmax.f32 %v1133, 1e-24
        %v1160 = vmax.f32 %v1135, 1e-24
        %v1161 = vmax.f32 %v1137, 1e-24
        %v1162 = vmax.f32 %v1139, 1e-24
        %v1163 = vmax.f32 %v1141, 1e-24
        %v1164 = vmax.f32 %v1143, 1e-24
        %v1165 = vmax.f32 %v1145, 1e-24
        %v1166 = vmax.f32 %v1147, 1e-24
        %v1167 = vmax.f32 %v1149, 1e-24
        %v1168 = vmax.f32 %v1151, 1e-24
        %v1169 = vmax.f32 %v1153, 1e-24
        %v1170 = vrsqrt.pop %v1154
        %v1171 = vrsqrt.pop %v1155
        %v1172 = vrsqrt.pop %v1156
        %v1173 = vrsqrt.pop %v1157
        %v1174 = vrsqrt.pop %v1158
        %v1175 = vrsqrt.pop %v1159
        %v1176 = vrsqrt.pop %v1160
        %v1177 = vrsqrt.pop %v1161
        %v1178 = vrsqrt.pop %v1162
        %v1179 = vrsqrt.pop %v1163
        %v1180 = vrsqrt.pop %v1164
        %v1181 = vrsqrt.pop %v1165
        %v1182 = vrsqrt.pop %v1166
        %v1183 = vrsqrt.pop %v1167
        %v1184 = vrsqrt.pop %v1168
        %v1185 = vrsqrt.pop %v1169
        %v1186 = vmul.f32 %v1090, %v1170
        %v1187 = vmul.f32 %v1091, %v1171
        %v1188 = vmul.f32 %v1092, %v1172
        %v1189 = vmul.f32 %v1093, %v1173
        %v1190 = vmul.f32 %v1094, %v1174
        %v1191 = vmul.f32 %v1095, %v1175
        %v1192 = vmul.f32 %v1096, %v1176
        %v1193 = vmul.f32 %v1097, %v1177
        %v1194 = vmul.f32 %v1098, %v1178
        %v1195 = vmul.f32 %v1099, %v1179
        %v1196 = vmul.f32 %v1100, %v1180
        %v1197 = vmul.f32 %v1101, %v1181
        %v1198 = vmul.f32 %v1102, %v1182
        %v1199 = vmul.f32 %v1103, %v1183
        %v1200 = vmul.f32 %v1104, %v1184
        %v1201 = vmul.f32 %v1105, %v1185
        %v1202 = vmax.f32 %v1186, 0.0
        %v1203 = vmax.f32 %v1187, 0.0
        %v1204 = vmax.f32 %v1188, 0.0
        %v1205 = vmax.f32 %v1189, 0.0
        %v1206 = vmax.f32 %v1190, 0.0
        %v1207 = vmax.f32 %v1191, 0.0
        %v1208 = vmax.f32 %v1192, 0.0
        %v1209 = vmax.f32 %v1193, 0.0
        %v1210 = vmax.f32 %v1194, 0.0
        %v1211 = vmax.f32 %v1195, 0.0
        %v1212 = vmax.f32 %v1196, 0.0
        %v1213 = vmax.f32 %v1197, 0.0
        %v1214 = vmax.f32 %v1198, 0.0
        %v1215 = vmax.f32 %v1199, 0.0
        %v1216 = vmax.f32 %v1200, 0.0
        %v1217 = vmax.f32 %v1201, 0.0
        %v1218 = vlaneseq
        %v1219 = vshrl.u32 %v1218, 7
        %v1220 = vadd.s32 %v1219, 8
        %v1221 = vadd.s32 %v1219, 16
        %v1222 = vadd.s32 %v1219, 24
        %v1223 = vadd.s32 %v1219, 32
        %v1224 = vadd.s32 %v1219, 40
        %v1225 = vadd.s32 %v1219, 48
        %v1226 = vadd.s32 %v1219, 56
        %v1227 = vadd.s32 %v1219, 64
        %v1228 = vadd.s32 %v1219, 72
        %v1229 = vadd.s32 %v1219, 80
        %v1230 = vadd.s32 %v1219, 88
        %v1231 = vadd.s32 %v1219, 96
        %v1232 = vadd.s32 %v1219, 104
        %v1233 = vadd.s32 %v1219, 112
        %v1234 = vadd.s32 %v1219, 120
        %v1235 = vstv %s363
        %v1236 = vadd.s32 %v1235, %v1219
        %v1237 = vadd.s32 %v1235, %v1220
        %v1238 = vadd.s32 %v1235, %v1221
        %v1239 = vadd.s32 %v1235, %v1222
        %v1240 = vadd.s32 %v1235, %v1223
        %v1241 = vadd.s32 %v1235, %v1224
        %v1242 = vadd.s32 %v1235, %v1225
        %v1243 = vadd.s32 %v1235, %v1226
        %v1244 = vadd.s32 %v1235, %v1227
        %v1245 = vadd.s32 %v1235, %v1228
        %v1246 = vadd.s32 %v1235, %v1229
        %v1247 = vadd.s32 %v1235, %v1230
        %v1248 = vadd.s32 %v1235, %v1231
        %v1249 = vadd.s32 %v1235, %v1232
        %v1250 = vadd.s32 %v1235, %v1233
        %v1251 = vadd.s32 %v1235, %v1234
        %vm1252 = vcmp.lt.s32.totalorder %v1236, 200
        %vm1253 = vcmp.lt.s32.totalorder %v1237, 200
        %vm1254 = vcmp.lt.s32.totalorder %v1238, 200
        %vm1255 = vcmp.lt.s32.totalorder %v1239, 200
        %vm1256 = vcmp.lt.s32.totalorder %v1240, 200
        %vm1257 = vcmp.lt.s32.totalorder %v1241, 200
        %vm1258 = vcmp.lt.s32.totalorder %v1242, 200
        %vm1259 = vcmp.lt.s32.totalorder %v1243, 200
        %vm1260 = vcmp.lt.s32.totalorder %v1244, 200
        %vm1261 = vcmp.lt.s32.totalorder %v1245, 200
        %vm1262 = vcmp.lt.s32.totalorder %v1246, 200
        %vm1263 = vcmp.lt.s32.totalorder %v1247, 200
        %vm1264 = vcmp.lt.s32.totalorder %v1248, 200
        %vm1265 = vcmp.lt.s32.totalorder %v1249, 200
        %vm1266 = vcmp.lt.s32.totalorder %v1250, 200
        %vm1267 = vcmp.lt.s32.totalorder %v1251, 200
        %v1268 = vsel %vm1252, 1, 0
        %v1269 = vsel %vm1253, 1, 0
        %v1270 = vsel %vm1254, 1, 0
        %v1271 = vsel %vm1255, 1, 0
        %v1272 = vsel %vm1256, 1, 0
        %v1273 = vsel %vm1257, 1, 0
        %v1274 = vsel %vm1258, 1, 0
        %v1275 = vsel %vm1259, 1, 0
        %v1276 = vsel %vm1260, 1, 0
        %v1277 = vsel %vm1261, 1, 0
        %v1278 = vsel %vm1262, 1, 0
        %v1279 = vsel %vm1263, 1, 0
        %v1280 = vsel %vm1264, 1, 0
        %v1281 = vsel %vm1265, 1, 0
        %v1282 = vsel %vm1266, 1, 0
        %v1283 = vsel %vm1267, 1, 0
        %vm1284 = vcmp.eq.s32.totalorder %v1268, 1
        %vm1285 = vcmp.eq.s32.totalorder %v1269, 1
        %vm1286 = vcmp.eq.s32.totalorder %v1270, 1
        %vm1287 = vcmp.eq.s32.totalorder %v1271, 1
        %vm1288 = vcmp.eq.s32.totalorder %v1272, 1
        %vm1289 = vcmp.eq.s32.totalorder %v1273, 1
        %vm1290 = vcmp.eq.s32.totalorder %v1274, 1
        %vm1291 = vcmp.eq.s32.totalorder %v1275, 1
        %vm1292 = vcmp.eq.s32.totalorder %v1276, 1
        %vm1293 = vcmp.eq.s32.totalorder %v1277, 1
        %vm1294 = vcmp.eq.s32.totalorder %v1278, 1
        %vm1295 = vcmp.eq.s32.totalorder %v1279, 1
        %vm1296 = vcmp.eq.s32.totalorder %v1280, 1
        %vm1297 = vcmp.eq.s32.totalorder %v1281, 1
        %vm1298 = vcmp.eq.s32.totalorder %v1282, 1
        %vm1299 = vcmp.eq.s32.totalorder %v1283, 1
        %v1300 = vsel %vm1284, %v1202, 0.0
        %v1301 = vsel %vm1285, %v1203, 0.0
        %v1302 = vsel %vm1286, %v1204, 0.0
        %v1303 = vsel %vm1287, %v1205, 0.0
        %v1304 = vsel %vm1288, %v1206, 0.0
        %v1305 = vsel %vm1289, %v1207, 0.0
        %v1306 = vsel %vm1290, %v1208, 0.0
        %v1307 = vsel %vm1291, %v1209, 0.0
        %v1308 = vsel %vm1292, %v1210, 0.0
        %v1309 = vsel %vm1293, %v1211, 0.0
        %v1310 = vsel %vm1294, %v1212, 0.0
        %v1311 = vsel %vm1295, %v1213, 0.0
        %v1312 = vsel %vm1296, %v1214, 0.0
        %v1313 = vsel %vm1297, %v1215, 0.0
        %v1314 = vsel %vm1298, %v1216, 0.0
        %v1315 = vsel %vm1299, %v1217, 0.0
        %1316 = vst [vmem:[%s345] sm:$0xff] %v1300
        %1317 = vst [vmem:[%s345 + $0x8] sm:$0xff] %v1301
        %1318 = vst [vmem:[%s345 + $0x10] sm:$0xff] %v1302
        %1319 = vst [vmem:[%s345 + $0x18] sm:$0xff] %v1303
        %1320 = vst [vmem:[%s345 + $0x20] sm:$0xff] %v1304
        %1321 = vst [vmem:[%s345 + $0x28] sm:$0xff] %v1305
        %1322 = vst [vmem:[%s345 + $0x30] sm:$0xff] %v1306
        %1323 = vst [vmem:[%s345 + $0x38] sm:$0xff] %v1307
        %1324 = vst [vmem:[%s345 + $0x40] sm:$0xff] %v1308
        %1325 = vst [vmem:[%s345 + $0x48] sm:$0xff] %v1309
        %1326 = vst [vmem:[%s345 + $0x50] sm:$0xff] %v1310
        %1327 = vst [vmem:[%s345 + $0x58] sm:$0xff] %v1311
        %1328 = vst [vmem:[%s345 + $0x60] sm:$0xff] %v1312
        %1329 = vst [vmem:[%s345 + $0x68] sm:$0xff] %v1313
        %1330 = vst [vmem:[%s345 + $0x70] sm:$0xff] %v1314
        %1331 = vst [vmem:[%s345 + $0x78] sm:$0xff] %v1315
        %v1332 = vadd.f32 %v1300, %v1301
        %v1333 = vadd.f32 %v1332, %v1302
        %v1334 = vadd.f32 %v1333, %v1303
        %v1335 = vadd.f32 %v1334, %v1304
        %v1336 = vadd.f32 %v1335, %v1305
        %v1337 = vadd.f32 %v1336, %v1306
        %v1338 = vadd.f32 %v1337, %v1307
        %v1339 = vadd.f32 %v1338, %v1308
        %v1340 = vadd.f32 %v1339, %v1309
        %v1341 = vadd.f32 %v1340, %v1310
        %v1342 = vadd.f32 %v1341, %v1311
        %v1343 = vadd.f32 %v1342, %v1312
        %v1344 = vadd.f32 %v1343, %v1313
        %v1345 = vadd.f32 %v1344, %v1314
        %v1346 = vadd.f32 %v1345, %v1315
        %v1347 = vrot.slane %v1346, 4
        %v1348 = vadd.f32 %v1346, %v1347
        %v1349 = vrot.slane %v1348, 2
        %v1350 = vadd.f32 %v1348, %v1349
        %v1351 = vrot.slane %v1350, 1
        %v1352 = vadd.f32 %v1350, %v1351
        %v1353 = vmul.f32 %v1300, %v1300
        %v1354 = vmul.f32 %v1301, %v1301
        %v1355 = vmul.f32 %v1302, %v1302
        %v1356 = vmul.f32 %v1303, %v1303
        %v1357 = vmul.f32 %v1304, %v1304
        %v1358 = vmul.f32 %v1305, %v1305
        %v1359 = vmul.f32 %v1306, %v1306
        %v1360 = vmul.f32 %v1307, %v1307
        %v1361 = vmul.f32 %v1308, %v1308
        %v1362 = vmul.f32 %v1309, %v1309
        %v1363 = vmul.f32 %v1310, %v1310
        %v1364 = vmul.f32 %v1311, %v1311
        %v1365 = vmul.f32 %v1312, %v1312
        %v1366 = vmul.f32 %v1313, %v1313
        %v1367 = vmul.f32 %v1314, %v1314
        %v1368 = vmul.f32 %v1315, %v1315
        %v1369 = vadd.f32 %v1353, %v1354
        %v1370 = vadd.f32 %v1369, %v1355
        %v1371 = vadd.f32 %v1370, %v1356
        %v1372 = vadd.f32 %v1371, %v1357
        %v1373 = vadd.f32 %v1372, %v1358
        %v1374 = vadd.f32 %v1373, %v1359
        %v1375 = vadd.f32 %v1374, %v1360
        %v1376 = vadd.f32 %v1375, %v1361
        %v1377 = vadd.f32 %v1376, %v1362
        %v1378 = vadd.f32 %v1377, %v1363
        %v1379 = vadd.f32 %v1378, %v1364
        %v1380 = vadd.f32 %v1379, %v1365
        %v1381 = vadd.f32 %v1380, %v1366
        %v1382 = vadd.f32 %v1381, %v1367
        %v1383 = vadd.f32 %v1382, %v1368
        %v1384 = vrot.slane %v1383, 4
        %v1385 = vadd.f32 %v1383, %v1384
        %v1386 = vrot.slane %v1385, 2
        %v1387 = vadd.f32 %v1385, %v1386
        %v1388 = vrot.slane %v1387, 1
        %v1389 = vadd.f32 %v1387, %v1388
        %1390 = vst [vmem:[%s352] sm:$0xff] %v1352
        %1391 = vst [vmem:[%s359] sm:$0xff] %v1389
        %s1392 = sand.u32 %s148, 1
        %s1393 = scalar_lea.sflag [#allocation4], %s1392
        %s1394 = sand.u32 %s148, 1
        %s1395 = smul.addr %s1394, 128
        %s1396 = scalar_lea.vmem [#allocation10], %s1395
        %s1397 = sand.u32 %s30, 1
        %s1398 = scalar_lea.sflag [#allocation12], %s1397
        %s1399 = sand.u32 %s174, 1
        %s1400 = smul.addr %s1399, 8
        %s1401 = scalar_lea.vmem [#allocation11], %s1400
        %s1402 = sand.u32 %s30, 1
        %s1403 = scalar_lea.sflag [#allocation12], %s1402
        %s1404 = sand.u32 %s200, 1
        %s1405 = smul.addr %s1404, 8
        %s1406 = scalar_lea.vmem [#allocation13], %s1405
        // Predicated region
        $region57: #{tpu_custom_call.1} parent=39 // pred_check
          %p1407 = pneg %p158
        $region58: #{tpu_custom_call.1} parent=39 // pred_check_branch
          %1409 = sbr.rel (%p1407) target = $region60
        $region59: #{tpu_custom_call.1} parent=39 // pred_region
          %s1410 = smul.u32 16, %s30
          %s1412 = ssub.s32 2048, 2048
          %1413 = vsyncadd %s1393, %s1412
          %s1414 = smul.addr %s1410, 128
          %s1415 = scalar_lea.hbm %s5, %s1414
          %s1416 = sshll.u32 %s1396, 4
          %s1417 = int_to_ptr.vmem [resolvable:$true] %s1416
          %1422 = dma.vmem_to_hbm [thread:$0]  %s1417, 2048, %s1415, %s1393, 128, 128, 8
        $region60: #{tpu_custom_call.1} parent=39 // pred_fallthru
          _
        // Predicated region
        $region61: #{tpu_custom_call.1} parent=39 // pred_check
          %p1423 = pneg %p184
        $region62: #{tpu_custom_call.1} parent=39 // pred_check_branch
          %1425 = sbr.rel (%p1423) target = $region64
        $region63: #{tpu_custom_call.1} parent=39 // pred_region
          %s1427 = ssub.s32 128, 128
          %1428 = vsyncadd %s1398, %s1427
          %s1429 = smul.addr %s30, 128
          %s1430 = scalar_lea.hbm %s6, %s1429
          %s1432 = sshll.u32 %s1401, 4
          %s1433 = int_to_ptr.vmem [resolvable:$true] %s1432
          %1435 = dma.vmem_to_hbm [thread:$0]  %s1433, 128, %s1430, %s1398
        $region64: #{tpu_custom_call.1} parent=39 // pred_fallthru
          _
        // Predicated region
        $region65: #{tpu_custom_call.1} parent=39 // pred_check
          %p1436 = pneg %p210
        $region66: #{tpu_custom_call.1} parent=39 // pred_check_branch
          %1438 = sbr.rel (%p1436) target = $region68
        $region67: #{tpu_custom_call.1} parent=39 // pred_region
          %s1440 = ssub.s32 128, 128
          %1441 = vsyncadd %s1403, %s1440
          %s1442 = smul.addr %s30, 128
          %s1443 = scalar_lea.hbm %s7, %s1442
          %s1445 = sshll.u32 %s1406, 4
          %s1446 = int_to_ptr.vmem [resolvable:$true] %s1445
          %1448 = dma.vmem_to_hbm [thread:$0]  %s1446, 128, %s1443, %s1403
        $region68: #{tpu_custom_call.1} parent=39 // pred_fallthru
          _
      $region40: #{tpu_custom_call.1} parent=5 // pred_fallthru
        _
      %p1449 = scmp.le.s32.totalorder 2, %s25
      // Predicated region
      $region69: #{tpu_custom_call.1} parent=5 // pred_check
        %p1450 = pneg %p1449
      $region70: #{tpu_custom_call.1} parent=5 // pred_check_branch
        %1452 = sbr.rel (%p1450) target = $region72
      $region71: #{tpu_custom_call.1} parent=5 // pred_region
        %s1453 = ssub.s32 %s25, 2
        // Predicated region
        $region73: #{tpu_custom_call.1} parent=71 // pred_check
          %p1454 = pneg %p164
        $region74: #{tpu_custom_call.1} parent=71 // pred_check_branch
          %1456 = sbr.rel (%p1454) target = $region76
        $region75: #{tpu_custom_call.1} parent=71 // pred_region
          %s1457 = sand.u32 %s149, 1
          %s1458 = scalar_lea.sflag [#allocation4], %s1457
          %s1459 = sand.u32 %s149, 1
          %s1460 = smul.addr %s1459, 128
          %s1461 = scalar_lea.vmem [#allocation10], %s1460
          %1462 = dma.done %s1458, 2048
        $region76: #{tpu_custom_call.1} parent=71 // pred_fallthru
          _
        // Predicated region
        $region77: #{tpu_custom_call.1} parent=71 // pred_check
          %p1463 = pneg %p190
        $region78: #{tpu_custom_call.1} parent=71 // pred_check_branch
          %1465 = sbr.rel (%p1463) target = $region80
        $region79: #{tpu_custom_call.1} parent=71 // pred_region
          %s1466 = sand.u32 %s31, 1
          %s1467 = scalar_lea.sflag [#allocation12], %s1466
          %s1468 = sand.u32 %s175, 1
          %s1469 = smul.addr %s1468, 8
          %s1470 = scalar_lea.vmem [#allocation11], %s1469
          %1471 = dma.done %s1467, 128
        $region80: #{tpu_custom_call.1} parent=71 // pred_fallthru
          _
        // Predicated region
        $region81: #{tpu_custom_call.1} parent=71 // pred_check
          %p1472 = pneg %p216
        $region82: #{tpu_custom_call.1} parent=71 // pred_check_branch
          %1474 = sbr.rel (%p1472) target = $region84
        $region83: #{tpu_custom_call.1} parent=71 // pred_region
          %s1475 = sand.u32 %s31, 1
          %s1476 = scalar_lea.sflag [#allocation12], %s1475
          %s1477 = sand.u32 %s201, 1
          %s1478 = smul.addr %s1477, 8
          %s1479 = scalar_lea.vmem [#allocation13], %s1478
          %1480 = dma.done %s1476, 128
        $region84: #{tpu_custom_call.1} parent=71 // pred_fallthru
          _
      $region72: #{tpu_custom_call.1} parent=5 // pred_fallthru
        _
    $region6: #{tpu_custom_call.1} parent=1 // loop_footer
      %s29 = sadd.s32 1, %s25
    $region7: #{tpu_custom_call.1} parent=1 // loop_footer_branch
      %24 = sbr.rel target = $region3
    $region8: #{tpu_custom_call.1} parent=1 // loop_exit
      _
    %1481 = vsyncpa [#allocation3], 1
    %s1482 = scalar_lea.sflag [#allocation3], 1
    %1483 = vsyncpa %s1482, 1
    %1484 = vsyncpa [#allocation6], 1
    %1485 = vsyncpa [#allocation9], 1
    %1486 = vsyncpa [#allocation4], 1
    %s1487 = scalar_lea.sflag [#allocation4], 1
    %1488 = vsyncpa %s1487, 1
    %1489 = vsyncpa [#allocation12], 1
    %s1490 = scalar_lea.sflag [#allocation12], 1
    %1491 = vsyncpa %s1490, 1

</llo_original>
